<compile_context>
chip_gen: v7x
topology: tpu7x:2x2x1
jax: 0.10.0
libtpu: 0.0.40
codegen_flags: <defaults>
</compile_context>

<pallas_src>
import numpy as np
import jax
import jax.numpy as jnp
from jax import lax
from jax.experimental import pallas as pl
from jax.experimental.pallas import tpu as pltpu

# ---------------------------------------------------------------------------
# Problem sizes
# ---------------------------------------------------------------------------
B = 2           # batch
CIN = 4         # in_channels
COUT = 8        # out_channels
CP = 8          # input channels zero-padded to 8 so every im2col tap is exactly
                # one (8, 512) sublane-group (aligned slab stores, no relayout)
H = W = 16
HW = H * W
BHW = B * HW                    # 512 lanes
HO, WO = H // 2, W // 2
HOWO = HO * WO
BHOWO = B * HOWO                # 128 lanes (dense output store)
NEG_SLOPE = 0.2
_W_SHIFT = int(np.log2(W))      # H, W are powers of two

K1 = 9 * CP                     # conv1 im2col depth (72)
K2 = 9 * CP + CP                # conv2 im2col depth + fused residual rows (80)


# ---------------------------------------------------------------------------
# Pallas kernel: single invocation processes the whole batch
# ---------------------------------------------------------------------------
def _disc_resblock_kernel(x_ref, w1_ref, b1_ref, w2r_ref, b2r_ref,
                          pool_ref, out_ref, slab_ref):
    # ---- hoisted boundary masks (computed once, reused by both convs) ----
    # lane = b*HW + h*W + w; since HW is a multiple of H*W, (h, w) depend only
    # on lane % HW, which the bit tricks below extract batch-independently.
    lane = lax.broadcasted_iota(jnp.int32, (1, BHW), 1)
    h_idx = (lane >> _W_SHIFT) & (H - 1)
    w_idx = lane & (W - 1)
    h_ok = {-1: h_idx >= 1, 0: None, 1: h_idx <= H - 2}
    w_ok = {-1: w_idx >= 1, 0: None, 1: w_idx <= W - 2}
    masks = {}
    for dh in (-1, 0, 1):
        for dw in (-1, 0, 1):
            mh, mw = h_ok[dh], w_ok[dw]
            if mh is None:
                masks[(dh, dw)] = mw
            elif mw is None:
                masks[(dh, dw)] = mh
            else:
                masks[(dh, dw)] = mh & mw

    def leaky(v):
        return jnp.maximum(v, NEG_SLOPE * v)

    def build_im2col(a):
        # Write the 9 shifted + masked taps of `a` (CP, BHW) into slab rows [0, 72).
        k = 0
        for dh in (-1, 0, 1):
            for dw in (-1, 0, 1):
                off = dh * W + dw
                if off == 0:
                    tap = a
                else:
                    # want tap[c, l] = a[c, l + off]  (roll left by off)
                    tap = pltpu.roll(a, shift=(-off) % BHW, axis=1)
                m = masks[(dh, dw)]
                if m is not None:
                    # zero-padding semantics: mask out-of-image / cross-batch lanes
                    tap = jnp.where(m, tap, 0.0)
                slab_ref[k * CP:(k + 1) * CP, :] = tap   # 8-sublane aligned store
                k += 1

    x = x_ref[...]                                       # (CP, BHW)

    # Fused residual: raw-x channel rows go straight into the conv2 slab tail.
    # Writing them first ends x's vreg live range before any slab reload.
    slab_ref[9 * CP:K2, :] = x

    # conv1: LeakyReLU(x) -> 3x3 conv, one MXU matmul with K = 72
    build_im2col(leaky(x))
    y1 = jnp.dot(w1_ref[...], slab_ref[:K1, :],
                 preferred_element_type=jnp.float32) + b1_ref[...]   # (COUT, BHW)

    # conv2 + residual 1x1 (fused): LeakyReLU(y1) taps (72 rows) + raw-x rows (8)
    # -> one MXU matmul with K = 80; bias column already holds b2 + br.
    build_im2col(leaky(y1))
    s = jnp.dot(w2r_ref[...], slab_ref[...],
                preferred_element_type=jnp.float32) + b2r_ref[...]   # (COUT, BHW)

    # 2x2 average pool for BOTH batch images at once via a block-diagonal pool
    # matrix: (COUT, 512) @ (512, 128) -> single dense 128-lane store.
    out_ref[...] = jnp.dot(s, pool_ref[...],
                           preferred_element_type=jnp.float32).astype(out_ref.dtype)


def disc_resblock_pallas(x_t, w1, b1, w2r, b2r, pool_big):
    """x_t: (CP, B*H*W) f32 (channels on sublanes).  Returns (COUT, B*HO*WO)."""
    grid_spec = pltpu.PrefetchScalarGridSpec(
        num_scalar_prefetch=0,
        grid=(1,),
        in_specs=[
            pl.BlockSpec((CP, BHW), lambda i: (0, 0)),          # x (transposed)
            pl.BlockSpec((COUT, K1), lambda i: (0, 0)),         # w1 im2col
            pl.BlockSpec((COUT, 1), lambda i: (0, 0)),          # b1
            pl.BlockSpec((COUT, K2), lambda i: (0, 0)),         # [w2 im2col | wr]
            pl.BlockSpec((COUT, 1), lambda i: (0, 0)),          # b2 + br
            pl.BlockSpec((BHW, BHOWO), lambda i: (0, 0)),       # block-diag pool
        ],
        out_specs=pl.BlockSpec((COUT, BHOWO), lambda i: (0, 0)),
        scratch_shapes=[pltpu.VMEM((K2, BHW), jnp.float32)],    # im2col slab
    )
    return pl.pallas_call(
        _disc_resblock_kernel,
        out_shape=jax.ShapeDtypeStruct((COUT, BHOWO), jnp.float32),
        grid_spec=grid_spec,
        compiler_params=pltpu.CompilerParams(dimension_semantics=("arbitrary",)),
    )(x_t, w1, b1, w2r, b2r, pool_big)


# ---------------------------------------------------------------------------
# Parameter setup glue (deterministic init + spectral norm, PyTorch semantics)
# ---------------------------------------------------------------------------
def spectral_normalize(w, key, eps=1e-12):
    """Mimics torch.nn.utils.spectral_norm at the first (training) forward:
    one power iteration from a random normalized u, then W / sigma."""
    w_mat = w.reshape(w.shape[0], -1)
    u = jax.random.normal(key, (w_mat.shape[0],), dtype=w.dtype)
    u = u / (jnp.linalg.norm(u) + eps)
    v = w_mat.T @ u
    v = v / (jnp.linalg.norm(v) + eps)
    u = w_mat @ v
    u = u / (jnp.linalg.norm(u) + eps)
    sigma = u @ (w_mat @ v)
    return w / sigma


def conv3x3_to_im2col(w_oihw):
    """(O, I, 3, 3) -> (O, 9*CP); column order = (kh*3+kw)*CP + ci, matching the
    slab built in-kernel.  Input channels zero-padded to CP."""
    O, I = w_oihw.shape[0], w_oihw.shape[1]
    w = jnp.pad(w_oihw, ((0, 0), (0, CP - I), (0, 0), (0, 0)))
    return jnp.transpose(w, (0, 2, 3, 1)).reshape(O, 9 * CP)


def make_pool_matrix_big():
    """Block-diagonal pool matrix (BHW, BHOWO):
    P[b*HW + h*W + w, b*HOWO + (h//2)*WO + (w//2)] = 0.25."""
    P = np.zeros((BHW, BHOWO), np.float32)
    for b in range(B):
        for h in range(H):
            for w in range(W):
                P[b * HW + h * W + w, b * HOWO + (h // 2) * WO + (w // 2)] = 0.25
    return jnp.asarray(P)


# ---------------------------------------------------------------------------
# Pure-JAX reference (NCHW, matches the PyTorch forward)
# ---------------------------------------------------------------------------
def reference_forward(x_nchw, w1_oihw, b1, w2_oihw, b2, wr_oihw, br):
    def leaky(v):
        return jnp.where(v > 0, v, NEG_SLOPE * v)

    def conv(inp, w, pad):
        return lax.conv_general_dilated(
            inp, w, window_strides=(1, 1), padding=((pad, pad), (pad, pad)),
            dimension_numbers=("NCHW", "OIHW", "NCHW"))

    a = leaky(x_nchw)
    y1 = conv(a, w1_oihw, 1) + b1[None, :, None, None]
    a2 = leaky(y1)
    y2 = conv(a2, w2_oihw, 1) + b2[None, :, None, None]
    res = conv(x_nchw, wr_oihw, 0) + br[None, :, None, None]
    s = y2 + res
    return s.reshape(B, COUT, HO, 2, WO, 2).mean(axis=(3, 5))


# ---------------------------------------------------------------------------
if __name__ == "__main__":
    key = jax.random.PRNGKey(0)
    kx, kw1, kb1, kw2, kb2, kwr, kbr, ku1, ku2, kur = jax.random.split(key, 10)

    # Input in PyTorch NCHW convention
    x_nchw = jax.random.normal(kx, (B, CIN, H, W), dtype=jnp.float32)

    # Deterministic weight init (PyTorch OIHW shapes), then spectral norm
    w1_raw = 0.1 * jax.random.normal(kw1, (COUT, CIN, 3, 3), dtype=jnp.float32)
    w2_raw = 0.1 * jax.random.normal(kw2, (COUT, COUT, 3, 3), dtype=jnp.float32)
    wr_raw = 0.1 * jax.random.normal(kwr, (COUT, CIN, 1, 1), dtype=jnp.float32)
    b1 = 0.05 * jax.random.normal(kb1, (COUT,), dtype=jnp.float32)
    b2 = 0.05 * jax.random.normal(kb2, (COUT,), dtype=jnp.float32)
    br = 0.05 * jax.random.normal(kbr, (COUT,), dtype=jnp.float32)

    w1_sn = spectral_normalize(w1_raw, ku1)
    w2_sn = spectral_normalize(w2_raw, ku2)
    wr_sn = spectral_normalize(wr_raw, kur)

    # Layout glue: NCHW -> (C_padded, B*H*W) channels-on-sublanes; weights -> im2col
    x_pad = jnp.pad(x_nchw, ((0, 0), (0, CP - CIN), (0, 0), (0, 0)))
    x_t = jnp.transpose(x_pad, (1, 0, 2, 3)).reshape(CP, BHW)

    w1_mat = conv3x3_to_im2col(w1_sn)                                # (8, 72)
    wr_mat = jnp.pad(wr_sn[:, :, 0, 0], ((0, 0), (0, CP - CIN)))     # (8, 8)
    # Fused conv2 + residual: [w2 im2col | wr], combined bias b2 + br.
    w2r_mat = jnp.concatenate([conv3x3_to_im2col(w2_sn), wr_mat], axis=1)  # (8, 80)
    b1_col = b1.reshape(COUT, 1)
    b2r_col = (b2 + br).reshape(COUT, 1)
    pool_big = make_pool_matrix_big()                                # (512, 128)

    out_t = disc_resblock_pallas(x_t, w1_mat, b1_col, w2r_mat, b2r_col, pool_big)
    out_t = jax.block_until_ready(out_t)

    # Back to NCHW for comparison against the reference
    out_nchw = jnp.transpose(out_t.reshape(COUT, B, HO, WO), (1, 0, 2, 3))
    ref = reference_forward(x_nchw, w1_sn, b1, w2_sn, b2, wr_sn, br)
    np.testing.assert_allclose(np.asarray(out_nchw), np.asarray(ref),
                               rtol=1e-3, atol=1e-3)

    print("KERNEL_OK")
</pallas_src>

<mosaic_0001>
module attributes {stable_mosaic.version = 11 : i64} {
  func.func @_disc_resblock_kernel(%arg0: i32, %arg1: memref<8x512xf32, #tpu.memory_space<vmem>>, %arg2: memref<8x72xf32, #tpu.memory_space<vmem>>, %arg3: memref<8x1xf32, #tpu.memory_space<vmem>>, %arg4: memref<8x80xf32, #tpu.memory_space<vmem>>, %arg5: memref<8x1xf32, #tpu.memory_space<vmem>>, %arg6: memref<512x128xf32, #tpu.memory_space<vmem>>, %arg7: memref<8x128xf32, #tpu.memory_space<vmem>>, %arg8: memref<80x512xf32, #tpu.memory_space<vmem>>) attributes {dimension_semantics = [#tpu.dimension_semantics<arbitrary>], iteration_bounds = array<i64: 1>, scalar_prefetch = 0 : i64, scratch_operands = 1 : i64, tpu.core_type = #tpu.core_type<tc>, window_params = [{pipeline_mode = #tpu.pipeline_mode<synchronous>, transform_indices = @transform_0, window_bounds = array<i64: 8, 512>}, {pipeline_mode = #tpu.pipeline_mode<synchronous>, transform_indices = @transform_1, window_bounds = array<i64: 8, 72>}, {pipeline_mode = #tpu.pipeline_mode<synchronous>, transform_indices = @transform_2, window_bounds = array<i64: 8, 1>}, {pipeline_mode = #tpu.pipeline_mode<synchronous>, transform_indices = @transform_3, window_bounds = array<i64: 8, 80>}, {pipeline_mode = #tpu.pipeline_mode<synchronous>, transform_indices = @transform_4, window_bounds = array<i64: 8, 1>}, {pipeline_mode = #tpu.pipeline_mode<synchronous>, transform_indices = @transform_5, window_bounds = array<i64: 512, 128>}, {pipeline_mode = #tpu.pipeline_mode<synchronous>, transform_indices = @transform_6, window_bounds = array<i64: 8, 128>}]} {
    %0 = tpu.iota {dimensions = array<i32: 1>} : vector<1x512xi32>
    %c4_i32 = arith.constant 4 : i32
    %1 = vector.broadcast %c4_i32 : i32 to vector<1x512xi32>
    %2 = arith.shrsi %0, %1 : vector<1x512xi32>
    %c15_i32 = arith.constant 15 : i32
    %3 = vector.broadcast %c15_i32 : i32 to vector<1x512xi32>
    %4 = arith.andi %2, %3 : vector<1x512xi32>
    %c15_i32_0 = arith.constant 15 : i32
    %5 = vector.broadcast %c15_i32_0 : i32 to vector<1x512xi32>
    %6 = arith.andi %0, %5 : vector<1x512xi32>
    %c1_i32 = arith.constant 1 : i32
    %7 = vector.broadcast %c1_i32 : i32 to vector<1x512xi32>
    %8 = arith.cmpi sge, %4, %7 : vector<1x512xi32>
    %c14_i32 = arith.constant 14 : i32
    %9 = vector.broadcast %c14_i32 : i32 to vector<1x512xi32>
    %10 = arith.cmpi sle, %4, %9 : vector<1x512xi32>
    %c1_i32_1 = arith.constant 1 : i32
    %11 = vector.broadcast %c1_i32_1 : i32 to vector<1x512xi32>
    %12 = arith.cmpi sge, %6, %11 : vector<1x512xi32>
    %c14_i32_2 = arith.constant 14 : i32
    %13 = vector.broadcast %c14_i32_2 : i32 to vector<1x512xi32>
    %14 = arith.cmpi sle, %6, %13 : vector<1x512xi32>
    %15 = arith.andi %8, %12 : vector<1x512xi1>
    %16 = arith.andi %8, %14 : vector<1x512xi1>
    %17 = arith.andi %10, %12 : vector<1x512xi1>
    %18 = arith.andi %10, %14 : vector<1x512xi1>
    %c0 = arith.constant 0 : index
    %c0_3 = arith.constant 0 : index
    %19 = vector.load %arg1[%c0, %c0_3] : memref<8x512xf32, #tpu.memory_space<vmem>>, vector<8x512xf32>
    %c72 = arith.constant 72 : index
    %c0_4 = arith.constant 0 : index
    %20 = vector.load %arg8[%c72, %c0_4] : memref<80x512xf32, #tpu.memory_space<vmem>>, vector<8x512xf32>
    tpu.vector_store %arg8[%c72, %c0_4], %19 {strides = array<i32>} : memref<80x512xf32, #tpu.memory_space<vmem>>, vector<8x512xf32>,
    %cst = arith.constant 2.000000e-01 : f32
    %21 = vector.broadcast %cst : f32 to vector<8x512xf32>
    %22 = arith.mulf %21, %19 : vector<8x512xf32>
    %23 = arith.maximumf %19, %22 : vector<8x512xf32>
    %c17_i32 = arith.constant 17 : i32
    %24 = tpu.dynamic_rotate %23 by %c17_i32 dim 1 : vector<8x512xf32>, i32 -> vector<8x512xf32>
    %cst_5 = arith.constant 0.000000e+00 : f32
    %25 = vector.shape_cast %15 : vector<1x512xi1> to vector<1x512xi1>
    %26 = vector.broadcast %25 : vector<1x512xi1> to vector<8x512xi1>
    %27 = vector.broadcast %cst_5 : f32 to vector<8x512xf32>
    %28 = arith.select %26, %24, %27 : vector<8x512xi1>, vector<8x512xf32>
    %c0_6 = arith.constant 0 : index
    %c0_7 = arith.constant 0 : index
    %29 = vector.load %arg8[%c0_6, %c0_7] : memref<80x512xf32, #tpu.memory_space<vmem>>, vector<8x512xf32>
    tpu.vector_store %arg8[%c0_6, %c0_7], %28 {strides = array<i32>} : memref<80x512xf32, #tpu.memory_space<vmem>>, vector<8x512xf32>,
    %c16_i32 = arith.constant 16 : i32
    %30 = tpu.dynamic_rotate %23 by %c16_i32 dim 1 : vector<8x512xf32>, i32 -> vector<8x512xf32>
    %cst_8 = arith.constant 0.000000e+00 : f32
    %31 = vector.shape_cast %8 : vector<1x512xi1> to vector<1x512xi1>
    %32 = vector.broadcast %31 : vector<1x512xi1> to vector<8x512xi1>
    %33 = vector.broadcast %cst_8 : f32 to vector<8x512xf32>
    %34 = arith.select %32, %30, %33 : vector<8x512xi1>, vector<8x512xf32>
    %c8 = arith.constant 8 : index
    %c0_9 = arith.constant 0 : index
    %35 = vector.load %arg8[%c8, %c0_9] : memref<80x512xf32, #tpu.memory_space<vmem>>, vector<8x512xf32>
    tpu.vector_store %arg8[%c8, %c0_9], %34 {strides = array<i32>} : memref<80x512xf32, #tpu.memory_space<vmem>>, vector<8x512xf32>,
    %c15_i32_10 = arith.constant 15 : i32
    %36 = tpu.dynamic_rotate %23 by %c15_i32_10 dim 1 : vector<8x512xf32>, i32 -> vector<8x512xf32>
    %cst_11 = arith.constant 0.000000e+00 : f32
    %37 = vector.shape_cast %16 : vector<1x512xi1> to vector<1x512xi1>
    %38 = vector.broadcast %37 : vector<1x512xi1> to vector<8x512xi1>
    %39 = vector.broadcast %cst_11 : f32 to vector<8x512xf32>
    %40 = arith.select %38, %36, %39 : vector<8x512xi1>, vector<8x512xf32>
    %c16 = arith.constant 16 : index
    %c0_12 = arith.constant 0 : index
    %41 = vector.load %arg8[%c16, %c0_12] : memref<80x512xf32, #tpu.memory_space<vmem>>, vector<8x512xf32>
    tpu.vector_store %arg8[%c16, %c0_12], %40 {strides = array<i32>} : memref<80x512xf32, #tpu.memory_space<vmem>>, vector<8x512xf32>,
    %c1_i32_13 = arith.constant 1 : i32
    %42 = tpu.dynamic_rotate %23 by %c1_i32_13 dim 1 : vector<8x512xf32>, i32 -> vector<8x512xf32>
    %cst_14 = arith.constant 0.000000e+00 : f32
    %43 = vector.shape_cast %12 : vector<1x512xi1> to vector<1x512xi1>
    %44 = vector.broadcast %43 : vector<1x512xi1> to vector<8x512xi1>
    %45 = vector.broadcast %cst_14 : f32 to vector<8x512xf32>
    %46 = arith.select %44, %42, %45 : vector<8x512xi1>, vector<8x512xf32>
    %c24 = arith.constant 24 : index
    %c0_15 = arith.constant 0 : index
    %47 = vector.load %arg8[%c24, %c0_15] : memref<80x512xf32, #tpu.memory_space<vmem>>, vector<8x512xf32>
    tpu.vector_store %arg8[%c24, %c0_15], %46 {strides = array<i32>} : memref<80x512xf32, #tpu.memory_space<vmem>>, vector<8x512xf32>,
    %c32 = arith.constant 32 : index
    %c0_16 = arith.constant 0 : index
    %48 = vector.load %arg8[%c32, %c0_16] : memref<80x512xf32, #tpu.memory_space<vmem>>, vector<8x512xf32>
    tpu.vector_store %arg8[%c32, %c0_16], %23 {strides = array<i32>} : memref<80x512xf32, #tpu.memory_space<vmem>>, vector<8x512xf32>,
    %c511_i32 = arith.constant 511 : i32
    %49 = tpu.dynamic_rotate %23 by %c511_i32 dim 1 : vector<8x512xf32>, i32 -> vector<8x512xf32>
    %cst_17 = arith.constant 0.000000e+00 : f32
    %50 = vector.shape_cast %14 : vector<1x512xi1> to vector<1x512xi1>
    %51 = vector.broadcast %50 : vector<1x512xi1> to vector<8x512xi1>
    %52 = vector.broadcast %cst_17 : f32 to vector<8x512xf32>
    %53 = arith.select %51, %49, %52 : vector<8x512xi1>, vector<8x512xf32>
    %c40 = arith.constant 40 : index
    %c0_18 = arith.constant 0 : index
    %54 = vector.load %arg8[%c40, %c0_18] : memref<80x512xf32, #tpu.memory_space<vmem>>, vector<8x512xf32>
    tpu.vector_store %arg8[%c40, %c0_18], %53 {strides = array<i32>} : memref<80x512xf32, #tpu.memory_space<vmem>>, vector<8x512xf32>,
    %c497_i32 = arith.constant 497 : i32
    %55 = tpu.dynamic_rotate %23 by %c497_i32 dim 1 : vector<8x512xf32>, i32 -> vector<8x512xf32>
    %cst_19 = arith.constant 0.000000e+00 : f32
    %56 = vector.shape_cast %17 : vector<1x512xi1> to vector<1x512xi1>
    %57 = vector.broadcast %56 : vector<1x512xi1> to vector<8x512xi1>
    %58 = vector.broadcast %cst_19 : f32 to vector<8x512xf32>
    %59 = arith.select %57, %55, %58 : vector<8x512xi1>, vector<8x512xf32>
    %c48 = arith.constant 48 : index
    %c0_20 = arith.constant 0 : index
    %60 = vector.load %arg8[%c48, %c0_20] : memref<80x512xf32, #tpu.memory_space<vmem>>, vector<8x512xf32>
    tpu.vector_store %arg8[%c48, %c0_20], %59 {strides = array<i32>} : memref<80x512xf32, #tpu.memory_space<vmem>>, vector<8x512xf32>,
    %c496_i32 = arith.constant 496 : i32
    %61 = tpu.dynamic_rotate %23 by %c496_i32 dim 1 : vector<8x512xf32>, i32 -> vector<8x512xf32>
    %cst_21 = arith.constant 0.000000e+00 : f32
    %62 = vector.shape_cast %10 : vector<1x512xi1> to vector<1x512xi1>
    %63 = vector.broadcast %62 : vector<1x512xi1> to vector<8x512xi1>
    %64 = vector.broadcast %cst_21 : f32 to vector<8x512xf32>
    %65 = arith.select %63, %61, %64 : vector<8x512xi1>, vector<8x512xf32>
    %c56 = arith.constant 56 : index
    %c0_22 = arith.constant 0 : index
    %66 = vector.load %arg8[%c56, %c0_22] : memref<80x512xf32, #tpu.memory_space<vmem>>, vector<8x512xf32>
    tpu.vector_store %arg8[%c56, %c0_22], %65 {strides = array<i32>} : memref<80x512xf32, #tpu.memory_space<vmem>>, vector<8x512xf32>,
    %c495_i32 = arith.constant 495 : i32
    %67 = tpu.dynamic_rotate %23 by %c495_i32 dim 1 : vector<8x512xf32>, i32 -> vector<8x512xf32>
    %cst_23 = arith.constant 0.000000e+00 : f32
    %68 = vector.shape_cast %18 : vector<1x512xi1> to vector<1x512xi1>
    %69 = vector.broadcast %68 : vector<1x512xi1> to vector<8x512xi1>
    %70 = vector.broadcast %cst_23 : f32 to vector<8x512xf32>
    %71 = arith.select %69, %67, %70 : vector<8x512xi1>, vector<8x512xf32>
    %c64 = arith.constant 64 : index
    %c0_24 = arith.constant 0 : index
    %72 = vector.load %arg8[%c64, %c0_24] : memref<80x512xf32, #tpu.memory_space<vmem>>, vector<8x512xf32>
    tpu.vector_store %arg8[%c64, %c0_24], %71 {strides = array<i32>} : memref<80x512xf32, #tpu.memory_space<vmem>>, vector<8x512xf32>,
    %c0_25 = arith.constant 0 : index
    %c0_26 = arith.constant 0 : index
    %73 = vector.load %arg2[%c0_25, %c0_26] : memref<8x72xf32, #tpu.memory_space<vmem>>, vector<8x72xf32>
    %c0_27 = arith.constant 0 : index
    %c0_28 = arith.constant 0 : index
    %74 = vector.load %arg8[%c0_27, %c0_28] : memref<80x512xf32, #tpu.memory_space<vmem>>, vector<72x512xf32>
    %cst_29 = arith.constant dense<0.000000e+00> : vector<8x512xf32>
    %75 = tpu.matmul %73, %74, %cst_29 {dimension_numbers = #tpu.dot_dimension_numbers<[1], [0], [0], [1], [0, 0, 1, 1], [], []>} : vector<8x72xf32>, vector<72x512xf32>, vector<8x512xf32> -> vector<8x512xf32>
    %c0_30 = arith.constant 0 : index
    %c0_31 = arith.constant 0 : index
    %76 = vector.load %arg3[%c0_30, %c0_31] : memref<8x1xf32, #tpu.memory_space<vmem>>, vector<8x1xf32>
    %77 = vector.broadcast %76 : vector<8x1xf32> to vector<8x512xf32>
    %78 = arith.addf %75, %77 : vector<8x512xf32>
    %cst_32 = arith.constant 2.000000e-01 : f32
    %79 = vector.broadcast %cst_32 : f32 to vector<8x512xf32>
    %80 = arith.mulf %79, %78 : vector<8x512xf32>
    %81 = arith.maximumf %78, %80 : vector<8x512xf32>
    %c17_i32_33 = arith.constant 17 : i32
    %82 = tpu.dynamic_rotate %81 by %c17_i32_33 dim 1 : vector<8x512xf32>, i32 -> vector<8x512xf32>
    %cst_34 = arith.constant 0.000000e+00 : f32
    %83 = vector.shape_cast %15 : vector<1x512xi1> to vector<1x512xi1>
    %84 = vector.broadcast %83 : vector<1x512xi1> to vector<8x512xi1>
    %85 = vector.broadcast %cst_34 : f32 to vector<8x512xf32>
    %86 = arith.select %84, %82, %85 : vector<8x512xi1>, vector<8x512xf32>
    %c0_35 = arith.constant 0 : index
    %c0_36 = arith.constant 0 : index
    %87 = vector.load %arg8[%c0_35, %c0_36] : memref<80x512xf32, #tpu.memory_space<vmem>>, vector<8x512xf32>
    tpu.vector_store %arg8[%c0_35, %c0_36], %86 {strides = array<i32>} : memref<80x512xf32, #tpu.memory_space<vmem>>, vector<8x512xf32>,
    %c16_i32_37 = arith.constant 16 : i32
    %88 = tpu.dynamic_rotate %81 by %c16_i32_37 dim 1 : vector<8x512xf32>, i32 -> vector<8x512xf32>
    %cst_38 = arith.constant 0.000000e+00 : f32
    %89 = vector.shape_cast %8 : vector<1x512xi1> to vector<1x512xi1>
    %90 = vector.broadcast %89 : vector<1x512xi1> to vector<8x512xi1>
    %91 = vector.broadcast %cst_38 : f32 to vector<8x512xf32>
    %92 = arith.select %90, %88, %91 : vector<8x512xi1>, vector<8x512xf32>
    %c8_39 = arith.constant 8 : index
    %c0_40 = arith.constant 0 : index
    %93 = vector.load %arg8[%c8_39, %c0_40] : memref<80x512xf32, #tpu.memory_space<vmem>>, vector<8x512xf32>
    tpu.vector_store %arg8[%c8_39, %c0_40], %92 {strides = array<i32>} : memref<80x512xf32, #tpu.memory_space<vmem>>, vector<8x512xf32>,
    %c15_i32_41 = arith.constant 15 : i32
    %94 = tpu.dynamic_rotate %81 by %c15_i32_41 dim 1 : vector<8x512xf32>, i32 -> vector<8x512xf32>
    %cst_42 = arith.constant 0.000000e+00 : f32
    %95 = vector.shape_cast %16 : vector<1x512xi1> to vector<1x512xi1>
    %96 = vector.broadcast %95 : vector<1x512xi1> to vector<8x512xi1>
    %97 = vector.broadcast %cst_42 : f32 to vector<8x512xf32>
    %98 = arith.select %96, %94, %97 : vector<8x512xi1>, vector<8x512xf32>
    %c16_43 = arith.constant 16 : index
    %c0_44 = arith.constant 0 : index
    %99 = vector.load %arg8[%c16_43, %c0_44] : memref<80x512xf32, #tpu.memory_space<vmem>>, vector<8x512xf32>
    tpu.vector_store %arg8[%c16_43, %c0_44], %98 {strides = array<i32>} : memref<80x512xf32, #tpu.memory_space<vmem>>, vector<8x512xf32>,
    %c1_i32_45 = arith.constant 1 : i32
    %100 = tpu.dynamic_rotate %81 by %c1_i32_45 dim 1 : vector<8x512xf32>, i32 -> vector<8x512xf32>
    %cst_46 = arith.constant 0.000000e+00 : f32
    %101 = vector.shape_cast %12 : vector<1x512xi1> to vector<1x512xi1>
    %102 = vector.broadcast %101 : vector<1x512xi1> to vector<8x512xi1>
    %103 = vector.broadcast %cst_46 : f32 to vector<8x512xf32>
    %104 = arith.select %102, %100, %103 : vector<8x512xi1>, vector<8x512xf32>
    %c24_47 = arith.constant 24 : index
    %c0_48 = arith.constant 0 : index
    %105 = vector.load %arg8[%c24_47, %c0_48] : memref<80x512xf32, #tpu.memory_space<vmem>>, vector<8x512xf32>
    tpu.vector_store %arg8[%c24_47, %c0_48], %104 {strides = array<i32>} : memref<80x512xf32, #tpu.memory_space<vmem>>, vector<8x512xf32>,
    %c32_49 = arith.constant 32 : index
    %c0_50 = arith.constant 0 : index
    %106 = vector.load %arg8[%c32_49, %c0_50] : memref<80x512xf32, #tpu.memory_space<vmem>>, vector<8x512xf32>
    tpu.vector_store %arg8[%c32_49, %c0_50], %81 {strides = array<i32>} : memref<80x512xf32, #tpu.memory_space<vmem>>, vector<8x512xf32>,
    %c511_i32_51 = arith.constant 511 : i32
    %107 = tpu.dynamic_rotate %81 by %c511_i32_51 dim 1 : vector<8x512xf32>, i32 -> vector<8x512xf32>
    %cst_52 = arith.constant 0.000000e+00 : f32
    %108 = vector.shape_cast %14 : vector<1x512xi1> to vector<1x512xi1>
    %109 = vector.broadcast %108 : vector<1x512xi1> to vector<8x512xi1>
    %110 = vector.broadcast %cst_52 : f32 to vector<8x512xf32>
    %111 = arith.select %109, %107, %110 : vector<8x512xi1>, vector<8x512xf32>
    %c40_53 = arith.constant 40 : index
    %c0_54 = arith.constant 0 : index
    %112 = vector.load %arg8[%c40_53, %c0_54] : memref<80x512xf32, #tpu.memory_space<vmem>>, vector<8x512xf32>
    tpu.vector_store %arg8[%c40_53, %c0_54], %111 {strides = array<i32>} : memref<80x512xf32, #tpu.memory_space<vmem>>, vector<8x512xf32>,
    %c497_i32_55 = arith.constant 497 : i32
    %113 = tpu.dynamic_rotate %81 by %c497_i32_55 dim 1 : vector<8x512xf32>, i32 -> vector<8x512xf32>
    %cst_56 = arith.constant 0.000000e+00 : f32
    %114 = vector.shape_cast %17 : vector<1x512xi1> to vector<1x512xi1>
    %115 = vector.broadcast %114 : vector<1x512xi1> to vector<8x512xi1>
    %116 = vector.broadcast %cst_56 : f32 to vector<8x512xf32>
    %117 = arith.select %115, %113, %116 : vector<8x512xi1>, vector<8x512xf32>
    %c48_57 = arith.constant 48 : index
    %c0_58 = arith.constant 0 : index
    %118 = vector.load %arg8[%c48_57, %c0_58] : memref<80x512xf32, #tpu.memory_space<vmem>>, vector<8x512xf32>
    tpu.vector_store %arg8[%c48_57, %c0_58], %117 {strides = array<i32>} : memref<80x512xf32, #tpu.memory_space<vmem>>, vector<8x512xf32>,
    %c496_i32_59 = arith.constant 496 : i32
    %119 = tpu.dynamic_rotate %81 by %c496_i32_59 dim 1 : vector<8x512xf32>, i32 -> vector<8x512xf32>
    %cst_60 = arith.constant 0.000000e+00 : f32
    %120 = vector.shape_cast %10 : vector<1x512xi1> to vector<1x512xi1>
    %121 = vector.broadcast %120 : vector<1x512xi1> to vector<8x512xi1>
    %122 = vector.broadcast %cst_60 : f32 to vector<8x512xf32>
    %123 = arith.select %121, %119, %122 : vector<8x512xi1>, vector<8x512xf32>
    %c56_61 = arith.constant 56 : index
    %c0_62 = arith.constant 0 : index
    %124 = vector.load %arg8[%c56_61, %c0_62] : memref<80x512xf32, #tpu.memory_space<vmem>>, vector<8x512xf32>
    tpu.vector_store %arg8[%c56_61, %c0_62], %123 {strides = array<i32>} : memref<80x512xf32, #tpu.memory_space<vmem>>, vector<8x512xf32>,
    %c495_i32_63 = arith.constant 495 : i32
    %125 = tpu.dynamic_rotate %81 by %c495_i32_63 dim 1 : vector<8x512xf32>, i32 -> vector<8x512xf32>
    %cst_64 = arith.constant 0.000000e+00 : f32
    %126 = vector.shape_cast %18 : vector<1x512xi1> to vector<1x512xi1>
    %127 = vector.broadcast %126 : vector<1x512xi1> to vector<8x512xi1>
    %128 = vector.broadcast %cst_64 : f32 to vector<8x512xf32>
    %129 = arith.select %127, %125, %128 : vector<8x512xi1>, vector<8x512xf32>
    %c64_65 = arith.constant 64 : index
    %c0_66 = arith.constant 0 : index
    %130 = vector.load %arg8[%c64_65, %c0_66] : memref<80x512xf32, #tpu.memory_space<vmem>>, vector<8x512xf32>
    tpu.vector_store %arg8[%c64_65, %c0_66], %129 {strides = array<i32>} : memref<80x512xf32, #tpu.memory_space<vmem>>, vector<8x512xf32>,
    %c0_67 = arith.constant 0 : index
    %c0_68 = arith.constant 0 : index
    %131 = vector.load %arg4[%c0_67, %c0_68] : memref<8x80xf32, #tpu.memory_space<vmem>>, vector<8x80xf32>
    %c0_69 = arith.constant 0 : index
    %c0_70 = arith.constant 0 : index
    %132 = vector.load %arg8[%c0_69, %c0_70] : memref<80x512xf32, #tpu.memory_space<vmem>>, vector<80x512xf32>
    %cst_71 = arith.constant dense<0.000000e+00> : vector<8x512xf32>
    %133 = tpu.matmul %131, %132, %cst_71 {dimension_numbers = #tpu.dot_dimension_numbers<[1], [0], [0], [1], [0, 0, 1, 1], [], []>} : vector<8x80xf32>, vector<80x512xf32>, vector<8x512xf32> -> vector<8x512xf32>
    %c0_72 = arith.constant 0 : index
    %c0_73 = arith.constant 0 : index
    %134 = vector.load %arg5[%c0_72, %c0_73] : memref<8x1xf32, #tpu.memory_space<vmem>>, vector<8x1xf32>
    %135 = vector.broadcast %134 : vector<8x1xf32> to vector<8x512xf32>
    %136 = arith.addf %133, %135 : vector<8x512xf32>
    %c0_74 = arith.constant 0 : index
    %c0_75 = arith.constant 0 : index
    %137 = vector.load %arg6[%c0_74, %c0_75] : memref<512x128xf32, #tpu.memory_space<vmem>>, vector<512x128xf32>
    %cst_76 = arith.constant dense<0.000000e+00> : vector<8x128xf32>
    %138 = tpu.matmul %136, %137, %cst_76 {dimension_numbers = #tpu.dot_dimension_numbers<[1], [0], [0], [1], [0, 0, 1, 1], [], []>} : vector<8x512xf32>, vector<512x128xf32>, vector<8x128xf32> -> vector<8x128xf32>
    %c0_77 = arith.constant 0 : index
    %c0_78 = arith.constant 0 : index
    %139 = vector.load %arg7[%c0_77, %c0_78] : memref<8x128xf32, #tpu.memory_space<vmem>>, vector<8x128xf32>
    tpu.vector_store %arg7[%c0_77, %c0_78], %138 {strides = array<i32>} : memref<8x128xf32, #tpu.memory_space<vmem>>, vector<8x128xf32>,
    return
  }
  func.func @transform_0(%arg0: i32) -> (i32, i32) {
    %c0_i32 = arith.constant 0 : i32
    %c0_i32_0 = arith.constant 0 : i32
    %c0_i32_1 = arith.constant 0 : i32
    return %c0_i32, %c0_i32_0 : i32, i32
  }
  func.func @transform_1(%arg0: i32) -> (i32, i32) {
    %c0_i32 = arith.constant 0 : i32
    %c0_i32_0 = arith.constant 0 : i32
    %c0_i32_1 = arith.constant 0 : i32
    return %c0_i32, %c0_i32_0 : i32, i32
  }
  func.func @transform_2(%arg0: i32) -> (i32, i32) {
    %c0_i32 = arith.constant 0 : i32
    %c0_i32_0 = arith.constant 0 : i32
    %c0_i32_1 = arith.constant 0 : i32
    return %c0_i32, %c0_i32_0 : i32, i32
  }
  func.func @transform_3(%arg0: i32) -> (i32, i32) {
    %c0_i32 = arith.constant 0 : i32
    %c0_i32_0 = arith.constant 0 : i32
    %c0_i32_1 = arith.constant 0 : i32
    return %c0_i32, %c0_i32_0 : i32, i32
  }
  func.func @transform_4(%arg0: i32) -> (i32, i32) {
    %c0_i32 = arith.constant 0 : i32
    %c0_i32_0 = arith.constant 0 : i32
    %c0_i32_1 = arith.constant 0 : i32
    return %c0_i32, %c0_i32_0 : i32, i32
  }
  func.func @transform_5(%arg0: i32) -> (i32, i32) {
    %c0_i32 = arith.constant 0 : i32
    %c0_i32_0 = arith.constant 0 : i32
    %c0_i32_1 = arith.constant 0 : i32
    return %c0_i32, %c0_i32_0 : i32, i32
  }
  func.func @transform_6(%arg0: i32) -> (i32, i32) {
    %c0_i32 = arith.constant 0 : i32
    %c0_i32_0 = arith.constant 0 : i32
    %c0_i32_1 = arith.constant 0 : i32
    return %c0_i32, %c0_i32_0 : i32, i32
  }
}

</mosaic_0001>

<llo_original>
// kernel: tpu_custom_call.1
$region0: #{tpu_custom_call.1}
  #allocation0 [shape = 'u32[]', space=smem, size = 0x4, offset = 0x4, fixed_abs, tag = 'smem constant byte address 0x4 - core index']
  #allocation1 [shape = 'u32[144,128]{1,0:T(1,128)}', space=vmem, size = 0x12000, scoped, tag = 'internal scratch']
  #allocation2 [shape = 'f32[80,512]{1,0:T(8,128)}', space=vmem, size = 0x28000, scoped, tag = 'scratch operand']
  %s0 = inlined_call_operand.hbm [shape: f32[8,512], index: 0, kind: input, shape index: {}]
  %s1 = inlined_call_operand.vmem [shape: f32[8,72], index: 1, kind: input, shape index: {}]
  %s2 = inlined_call_operand.vmem [shape: f32[8,1], index: 2, kind: input, shape index: {}]
  %s3 = inlined_call_operand.vmem [shape: f32[8,80], index: 3, kind: input, shape index: {}]
  %s4 = inlined_call_operand.vmem [shape: f32[8,1], index: 4, kind: input, shape index: {}]
  %s5 = inlined_call_operand.hbm [shape: f32[512,128], index: 5, kind: input, shape index: {}]
  %s6 = inlined_call_operand.hbm [shape: f32[8,128], index: 6, kind: output, shape index: {}]
  %s7 = sld [smem:[#allocation0]]
  $region42: #{tpu_custom_call.1} parent=0
    _
  %s9 = ssub.s32 1, %s7
  %s10 = scalar_select 0, %s9, %s7
  $region1: #{tpu_custom_call.1} parent=0
    #allocation3 [shape = 'u8[16384]{0}', space=vmem, size = 0x4000, scoped, tag = 'input window, operand 0, single buffered']
    #allocation4 [shape = 's32[1]{0}', space=sflag, size = 0x4, scoped, tag = 'scoped memory for tpu_custom_call.1']
    #allocation5 [shape = 's32[1]{0}', space=sflag, size = 0x4, scoped, tag = 'scoped memory for tpu_custom_call.1']
    #allocation6 [shape = 'u8[262144]{0}', space=vmem, size = 0x40000, scoped, tag = 'input window, operand 5, single buffered']
    #allocation7 [shape = 's32[1]{0}', space=sflag, size = 0x4, scoped, tag = 'scoped memory for tpu_custom_call.1']
    #allocation8 [shape = 'u8[4096]{0}', space=vmem, size = 0x1000, scoped, tag = 'output window, operand 0, single buffered']
    %11 = vsyncpa [#allocation4], 0
    %12 = vsyncpa [#allocation7], 0
    %13 = vsyncpa [#allocation5], 0
    // Predicated region
    $region2: #{tpu_custom_call.1} parent=1 // pred_check
      _
    $region3: #{tpu_custom_call.1} parent=1 // pred_check_branch
      %15 = sbr.rel (0) target = $region5
    $region4: #{tpu_custom_call.1} parent=1 // pred_region
      %s17 = ssub.s32 512, 512
      %18 = vsyncadd [#allocation4], %s17
      %s20 = sshll.u32 [#allocation3], 4
      %s21 = int_to_ptr.vmem [resolvable:$true] %s20
      %23 = dma.hbm_to_vmem [thread:$0]  %s0, 512, %s21, [#allocation4]
    $region5: #{tpu_custom_call.1} parent=1 // pred_fallthru
      _
    // Predicated region
    $region6: #{tpu_custom_call.1} parent=1 // pred_check
      _
    $region7: #{tpu_custom_call.1} parent=1 // pred_check_branch
      %25 = sbr.rel (0) target = $region9
    $region8: #{tpu_custom_call.1} parent=1 // pred_region
      _
    $region9: #{tpu_custom_call.1} parent=1 // pred_fallthru
      _
    // Predicated region
    $region10: #{tpu_custom_call.1} parent=1 // pred_check
      _
    $region11: #{tpu_custom_call.1} parent=1 // pred_check_branch
      %27 = sbr.rel (0) target = $region13
    $region12: #{tpu_custom_call.1} parent=1 // pred_region
      _
    $region13: #{tpu_custom_call.1} parent=1 // pred_fallthru
      _
    // Predicated region
    $region14: #{tpu_custom_call.1} parent=1 // pred_check
      _
    $region15: #{tpu_custom_call.1} parent=1 // pred_check_branch
      %29 = sbr.rel (0) target = $region17
    $region16: #{tpu_custom_call.1} parent=1 // pred_region
      _
    $region17: #{tpu_custom_call.1} parent=1 // pred_fallthru
      _
    // Predicated region
    $region18: #{tpu_custom_call.1} parent=1 // pred_check
      _
    $region19: #{tpu_custom_call.1} parent=1 // pred_check_branch
      %31 = sbr.rel (0) target = $region21
    $region20: #{tpu_custom_call.1} parent=1 // pred_region
      _
    $region21: #{tpu_custom_call.1} parent=1 // pred_fallthru
      _
    // Predicated region
    $region22: #{tpu_custom_call.1} parent=1 // pred_check
      _
    $region23: #{tpu_custom_call.1} parent=1 // pred_check_branch
      %33 = sbr.rel (0) target = $region25
    $region24: #{tpu_custom_call.1} parent=1 // pred_region
      %s35 = ssub.s32 8192, 8192
      %36 = vsyncadd [#allocation7], %s35
      %s37 = sshll.u32 [#allocation6], 4
      %s38 = int_to_ptr.vmem [resolvable:$true] %s37
      %43 = dma.hbm_to_vmem [thread:$0]  %s5, 8192, %s38, [#allocation7], 128, 128, 8
    $region25: #{tpu_custom_call.1} parent=1 // pred_fallthru
      _
    // Predicated region
    $region26: #{tpu_custom_call.1} parent=1 // pred_check
      _
    $region27: #{tpu_custom_call.1} parent=1 // pred_check_branch
      %45 = sbr.rel (0) target = $region29
    $region28: #{tpu_custom_call.1} parent=1 // pred_region
      %46 = dma.done [#allocation4], 512
    $region29: #{tpu_custom_call.1} parent=1 // pred_fallthru
      _
    // Predicated region
    $region30: #{tpu_custom_call.1} parent=1 // pred_check
      _
    $region31: #{tpu_custom_call.1} parent=1 // pred_check_branch
      %48 = sbr.rel (0) target = $region33
    $region32: #{tpu_custom_call.1} parent=1 // pred_region
      %49 = dma.done [#allocation7], 8192
    $region33: #{tpu_custom_call.1} parent=1 // pred_fallthru
      _
    %v50 = vlaneseq
    %v51 = vand.u32 %v50, 127
    %v52 = vadd.s32 %v51, 128
    %v53 = vadd.s32 %v51, 256
    %v54 = vadd.s32 %v51, 384
    %v55 = vshra.s32 %v51, 4
    %v56 = vshra.s32 %v52, 4
    %v57 = vshra.s32 %v53, 4
    %v58 = vshra.s32 %v54, 4
    %v59 = vand.u32 %v55, 15
    %v60 = vand.u32 %v56, 15
    %v61 = vand.u32 %v57, 15
    %v62 = vand.u32 %v58, 15
    %v63 = vand.u32 %v51, 15
    %v64 = vand.u32 %v52, 15
    %v65 = vand.u32 %v53, 15
    %v66 = vand.u32 %v54, 15
    %vm67 = vcmp.ge.s32.totalorder %v59, 1
    %vm68 = vcmp.ge.s32.totalorder %v60, 1
    %vm69 = vcmp.ge.s32.totalorder %v61, 1
    %vm70 = vcmp.ge.s32.totalorder %v62, 1
    %vm71 = vcmp.le.s32.totalorder %v59, 14
    %vm72 = vcmp.le.s32.totalorder %v60, 14
    %vm73 = vcmp.le.s32.totalorder %v61, 14
    %vm74 = vcmp.le.s32.totalorder %v62, 14
    %vm75 = vcmp.ge.s32.totalorder %v63, 1
    %vm76 = vcmp.ge.s32.totalorder %v64, 1
    %vm77 = vcmp.ge.s32.totalorder %v65, 1
    %vm78 = vcmp.ge.s32.totalorder %v66, 1
    %vm79 = vcmp.le.s32.totalorder %v63, 14
    %vm80 = vcmp.le.s32.totalorder %v64, 14
    %vm81 = vcmp.le.s32.totalorder %v65, 14
    %vm82 = vcmp.le.s32.totalorder %v66, 14
    %vm83 = vmand %vm67, %vm75
    %vm84 = vmand %vm68, %vm76
    %vm85 = vmand %vm69, %vm77
    %vm86 = vmand %vm70, %vm78
    %vm87 = vmand %vm67, %vm79
    %vm88 = vmand %vm68, %vm80
    %vm89 = vmand %vm69, %vm81
    %vm90 = vmand %vm70, %vm82
    %vm91 = vmand %vm71, %vm75
    %vm92 = vmand %vm72, %vm76
    %vm93 = vmand %vm73, %vm77
    %vm94 = vmand %vm74, %vm78
    %vm95 = vmand %vm71, %vm79
    %vm96 = vmand %vm72, %vm80
    %vm97 = vmand %vm73, %vm81
    %vm98 = vmand %vm74, %vm82
    %v99 = vld [vmem:[#allocation3] sm:$0xff]
    %v100 = vld [vmem:[#allocation3 + $0x8] sm:$0xff]
    %v101 = vld [vmem:[#allocation3 + $0x10] sm:$0xff]
    %v102 = vld [vmem:[#allocation3 + $0x18] sm:$0xff]
    %103 = vst [vmem:[#allocation2 + $0x120] sm:$0xff] %v99
    %104 = vst [vmem:[#allocation2 + $0x128] sm:$0xff] %v100
    %105 = vst [vmem:[#allocation2 + $0x130] sm:$0xff] %v101
    %106 = vst [vmem:[#allocation2 + $0x138] sm:$0xff] %v102
    %v107 = vmul.f32 %v99, 0.2
    %v108 = vmul.f32 %v100, 0.2
    %v109 = vmul.f32 %v101, 0.2
    %v110 = vmul.f32 %v102, 0.2
    %v111 = vmax.f32 %v99, %v107
    %v112 = vmax.f32 %v100, %v108
    %v113 = vmax.f32 %v101, %v109
    %v114 = vmax.f32 %v102, %v110
    %115 = vrot.lane.b32.xlu0 %v111, 17
    %v116 = vpop.permute.xlu0 %115
    %117 = vrot.lane.b32.xlu0 %v112, 17
    %v118 = vpop.permute.xlu0 %117
    %119 = vrot.lane.b32.xlu0 %v113, 17
    %v120 = vpop.permute.xlu0 %119
    %121 = vrot.lane.b32.xlu0 %v114, 17
    %v122 = vpop.permute.xlu0 %121
    %vm123 = vcmp.lt.s32.totalorder %v51, 17
    %v124 = vsel %vm123, %v120, %v122
    %v125 = vsel %vm123, %v118, %v120
    %v126 = vsel %vm123, %v116, %v118
    %v127 = vsel %vm123, %v122, %v116
    %v128 = vsel %vm83, 1, 0
    %v129 = vsel %vm84, 1, 0
    %v130 = vsel %vm85, 1, 0
    %v131 = vsel %vm86, 1, 0
    %vm132 = vcmp.eq.s32.totalorder %v128, 1
    %vm133 = vcmp.eq.s32.totalorder %v129, 1
    %vm134 = vcmp.eq.s32.totalorder %v130, 1
    %vm135 = vcmp.eq.s32.totalorder %v131, 1
    %v136 = vsel %vm132, %v127, 0.0
    %v137 = vsel %vm133, %v126, 0.0
    %v138 = vsel %vm134, %v125, 0.0
    %v139 = vsel %vm135, %v124, 0.0
    %140 = vst [vmem:[#allocation2] sm:$0xff] %v136
    %141 = vst [vmem:[#allocation2 + $0x8] sm:$0xff] %v137
    %142 = vst [vmem:[#allocation2 + $0x10] sm:$0xff] %v138
    %143 = vst [vmem:[#allocation2 + $0x18] sm:$0xff] %v139
    %144 = vrot.lane.b32.xlu0 %v111, 16
    %v145 = vpop.permute.xlu0 %144
    %146 = vrot.lane.b32.xlu0 %v112, 16
    %v147 = vpop.permute.xlu0 %146
    %148 = vrot.lane.b32.xlu0 %v113, 16
    %v149 = vpop.permute.xlu0 %148
    %150 = vrot.lane.b32.xlu0 %v114, 16
    %v151 = vpop.permute.xlu0 %150
    %vm152 = vcmp.lt.s32.totalorder %v51, 16
    %v153 = vsel %vm152, %v149, %v151
    %v154 = vsel %vm152, %v147, %v149
    %v155 = vsel %vm152, %v145, %v147
    %v156 = vsel %vm152, %v151, %v145
    %v157 = vsel %vm67, 1, 0
    %v158 = vsel %vm68, 1, 0
    %v159 = vsel %vm69, 1, 0
    %v160 = vsel %vm70, 1, 0
    %vm161 = vcmp.eq.s32.totalorder %v157, 1
    %vm162 = vcmp.eq.s32.totalorder %v158, 1
    %vm163 = vcmp.eq.s32.totalorder %v159, 1
    %vm164 = vcmp.eq.s32.totalorder %v160, 1
    %v165 = vsel %vm161, %v156, 0.0
    %v166 = vsel %vm162, %v155, 0.0
    %v167 = vsel %vm163, %v154, 0.0
    %v168 = vsel %vm164, %v153, 0.0
    %169 = vst [vmem:[#allocation2 + $0x20] sm:$0xff] %v165
    %170 = vst [vmem:[#allocation2 + $0x28] sm:$0xff] %v166
    %171 = vst [vmem:[#allocation2 + $0x30] sm:$0xff] %v167
    %172 = vst [vmem:[#allocation2 + $0x38] sm:$0xff] %v168
    %173 = vrot.lane.b32.xlu0 %v111, 15
    %v174 = vpop.permute.xlu0 %173
    %175 = vrot.lane.b32.xlu0 %v112, 15
    %v176 = vpop.permute.xlu0 %175
    %177 = vrot.lane.b32.xlu0 %v113, 15
    %v178 = vpop.permute.xlu0 %177
    %179 = vrot.lane.b32.xlu0 %v114, 15
    %v180 = vpop.permute.xlu0 %179
    %vm181 = vcmp.lt.s32.totalorder %v51, 15
    %v182 = vsel %vm181, %v178, %v180
    %v183 = vsel %vm181, %v176, %v178
    %v184 = vsel %vm181, %v174, %v176
    %v185 = vsel %vm181, %v180, %v174
    %v186 = vsel %vm87, 1, 0
    %v187 = vsel %vm88, 1, 0
    %v188 = vsel %vm89, 1, 0
    %v189 = vsel %vm90, 1, 0
    %vm190 = vcmp.eq.s32.totalorder %v186, 1
    %vm191 = vcmp.eq.s32.totalorder %v187, 1
    %vm192 = vcmp.eq.s32.totalorder %v188, 1
    %vm193 = vcmp.eq.s32.totalorder %v189, 1
    %v194 = vsel %vm190, %v185, 0.0
    %v195 = vsel %vm191, %v184, 0.0
    %v196 = vsel %vm192, %v183, 0.0
    %v197 = vsel %vm193, %v182, 0.0
    %198 = vst [vmem:[#allocation2 + $0x40] sm:$0xff] %v194
    %199 = vst [vmem:[#allocation2 + $0x48] sm:$0xff] %v195
    %200 = vst [vmem:[#allocation2 + $0x50] sm:$0xff] %v196
    %201 = vst [vmem:[#allocation2 + $0x58] sm:$0xff] %v197
    %202 = vrot.lane.b32.xlu0 %v111, 1
    %v203 = vpop.permute.xlu0 %202
    %204 = vrot.lane.b32.xlu0 %v112, 1
    %v205 = vpop.permute.xlu0 %204
    %206 = vrot.lane.b32.xlu0 %v113, 1
    %v207 = vpop.permute.xlu0 %206
    %208 = vrot.lane.b32.xlu0 %v114, 1
    %v209 = vpop.permute.xlu0 %208
    %vm210 = vcmp.lt.s32.totalorder %v51, 1
    %v211 = vsel %vm210, %v207, %v209
    %v212 = vsel %vm210, %v205, %v207
    %v213 = vsel %vm210, %v203, %v205
    %v214 = vsel %vm210, %v209, %v203
    %v215 = vsel %vm75, 1, 0
    %v216 = vsel %vm76, 1, 0
    %v217 = vsel %vm77, 1, 0
    %v218 = vsel %vm78, 1, 0
    %vm219 = vcmp.eq.s32.totalorder %v215, 1
    %vm220 = vcmp.eq.s32.totalorder %v216, 1
    %vm221 = vcmp.eq.s32.totalorder %v217, 1
    %vm222 = vcmp.eq.s32.totalorder %v218, 1
    %v223 = vsel %vm219, %v214, 0.0
    %v224 = vsel %vm220, %v213, 0.0
    %v225 = vsel %vm221, %v212, 0.0
    %v226 = vsel %vm222, %v211, 0.0
    %227 = vst [vmem:[#allocation2 + $0x60] sm:$0xff] %v223
    %228 = vst [vmem:[#allocation2 + $0x68] sm:$0xff] %v224
    %229 = vst [vmem:[#allocation2 + $0x70] sm:$0xff] %v225
    %230 = vst [vmem:[#allocation2 + $0x78] sm:$0xff] %v226
    %231 = vst [vmem:[#allocation2 + $0x80] sm:$0xff] %v111
    %232 = vst [vmem:[#allocation2 + $0x88] sm:$0xff] %v112
    %233 = vst [vmem:[#allocation2 + $0x90] sm:$0xff] %v113
    %234 = vst [vmem:[#allocation2 + $0x98] sm:$0xff] %v114
    %235 = vrot.lane.b32.xlu0 %v111, 127
    %v236 = vpop.permute.xlu0 %235
    %237 = vrot.lane.b32.xlu0 %v112, 127
    %v238 = vpop.permute.xlu0 %237
    %239 = vrot.lane.b32.xlu0 %v113, 127
    %v240 = vpop.permute.xlu0 %239
    %241 = vrot.lane.b32.xlu0 %v114, 127
    %v242 = vpop.permute.xlu0 %241
    %vm243 = vcmp.lt.s32.totalorder %v51, 127
    %v244 = vsel %vm243, %v240, %v242
    %v245 = vsel %vm243, %v238, %v240
    %v246 = vsel %vm243, %v236, %v238
    %v247 = vsel %vm243, %v242, %v236
    %v248 = vsel %vm79, 1, 0
    %v249 = vsel %vm80, 1, 0
    %v250 = vsel %vm81, 1, 0
    %v251 = vsel %vm82, 1, 0
    %vm252 = vcmp.eq.s32.totalorder %v248, 1
    %vm253 = vcmp.eq.s32.totalorder %v249, 1
    %vm254 = vcmp.eq.s32.totalorder %v250, 1
    %vm255 = vcmp.eq.s32.totalorder %v251, 1
    %v256 = vsel %vm252, %v246, 0.0
    %v257 = vsel %vm253, %v245, 0.0
    %v258 = vsel %vm254, %v244, 0.0
    %v259 = vsel %vm255, %v247, 0.0
    %260 = vst [vmem:[#allocation2 + $0xa0] sm:$0xff] %v256
    %261 = vst [vmem:[#allocation2 + $0xa8] sm:$0xff] %v257
    %262 = vst [vmem:[#allocation2 + $0xb0] sm:$0xff] %v258
    %263 = vst [vmem:[#allocation2 + $0xb8] sm:$0xff] %v259
    %264 = vrot.lane.b32.xlu0 %v111, 113
    %v265 = vpop.permute.xlu0 %264
    %266 = vrot.lane.b32.xlu0 %v112, 113
    %v267 = vpop.permute.xlu0 %266
    %268 = vrot.lane.b32.xlu0 %v113, 113
    %v269 = vpop.permute.xlu0 %268
    %270 = vrot.lane.b32.xlu0 %v114, 113
    %v271 = vpop.permute.xlu0 %270
    %vm272 = vcmp.lt.s32.totalorder %v51, 113
    %v273 = vsel %vm272, %v269, %v271
    %v274 = vsel %vm272, %v267, %v269
    %v275 = vsel %vm272, %v265, %v267
    %v276 = vsel %vm272, %v271, %v265
    %v277 = vsel %vm91, 1, 0
    %v278 = vsel %vm92, 1, 0
    %v279 = vsel %vm93, 1, 0
    %v280 = vsel %vm94, 1, 0
    %vm281 = vcmp.eq.s32.totalorder %v277, 1
    %vm282 = vcmp.eq.s32.totalorder %v278, 1
    %vm283 = vcmp.eq.s32.totalorder %v279, 1
    %vm284 = vcmp.eq.s32.totalorder %v280, 1
    %v285 = vsel %vm281, %v275, 0.0
    %v286 = vsel %vm282, %v274, 0.0
    %v287 = vsel %vm283, %v273, 0.0
    %v288 = vsel %vm284, %v276, 0.0
    %289 = vst [vmem:[#allocation2 + $0xc0] sm:$0xff] %v285
    %290 = vst [vmem:[#allocation2 + $0xc8] sm:$0xff] %v286
    %291 = vst [vmem:[#allocation2 + $0xd0] sm:$0xff] %v287
    %292 = vst [vmem:[#allocation2 + $0xd8] sm:$0xff] %v288
    %293 = vrot.lane.b32.xlu0 %v111, 112
    %v294 = vpop.permute.xlu0 %293
    %295 = vrot.lane.b32.xlu0 %v112, 112
    %v296 = vpop.permute.xlu0 %295
    %297 = vrot.lane.b32.xlu0 %v113, 112
    %v298 = vpop.permute.xlu0 %297
    %299 = vrot.lane.b32.xlu0 %v114, 112
    %v300 = vpop.permute.xlu0 %299
    %vm301 = vcmp.lt.s32.totalorder %v51, 112
    %v302 = vsel %vm301, %v298, %v300
    %v303 = vsel %vm301, %v296, %v298
    %v304 = vsel %vm301, %v294, %v296
    %v305 = vsel %vm301, %v300, %v294
    %v306 = vsel %vm71, 1, 0
    %v307 = vsel %vm72, 1, 0
    %v308 = vsel %vm73, 1, 0
    %v309 = vsel %vm74, 1, 0
    %vm310 = vcmp.eq.s32.totalorder %v306, 1
    %vm311 = vcmp.eq.s32.totalorder %v307, 1
    %vm312 = vcmp.eq.s32.totalorder %v308, 1
    %vm313 = vcmp.eq.s32.totalorder %v309, 1
    %v314 = vsel %vm310, %v304, 0.0
    %v315 = vsel %vm311, %v303, 0.0
    %v316 = vsel %vm312, %v302, 0.0
    %v317 = vsel %vm313, %v305, 0.0
    %318 = vst [vmem:[#allocation2 + $0xe0] sm:$0xff] %v314
    %319 = vst [vmem:[#allocation2 + $0xe8] sm:$0xff] %v315
    %320 = vst [vmem:[#allocation2 + $0xf0] sm:$0xff] %v316
    %321 = vst [vmem:[#allocation2 + $0xf8] sm:$0xff] %v317
    %322 = vrot.lane.b32.xlu0 %v111, 111
    %v323 = vpop.permute.xlu0 %322
    %324 = vrot.lane.b32.xlu0 %v112, 111
    %v325 = vpop.permute.xlu0 %324
    %326 = vrot.lane.b32.xlu0 %v113, 111
    %v327 = vpop.permute.xlu0 %326
    %328 = vrot.lane.b32.xlu0 %v114, 111
    %v329 = vpop.permute.xlu0 %328
    %vm330 = vcmp.lt.s32.totalorder %v51, 111
    %v331 = vsel %vm330, %v327, %v329
    %v332 = vsel %vm330, %v325, %v327
    %v333 = vsel %vm330, %v323, %v325
    %v334 = vsel %vm330, %v329, %v323
    %v335 = vsel %vm95, 1, 0
    %v336 = vsel %vm96, 1, 0
    %v337 = vsel %vm97, 1, 0
    %v338 = vsel %vm98, 1, 0
    %vm339 = vcmp.eq.s32.totalorder %v335, 1
    %vm340 = vcmp.eq.s32.totalorder %v336, 1
    %vm341 = vcmp.eq.s32.totalorder %v337, 1
    %vm342 = vcmp.eq.s32.totalorder %v338, 1
    %v343 = vsel %vm339, %v333, 0.0
    %v344 = vsel %vm340, %v332, 0.0
    %v345 = vsel %vm341, %v331, 0.0
    %v346 = vsel %vm342, %v334, 0.0
    %347 = vst [vmem:[#allocation2 + $0x100] sm:$0xff] %v343
    %348 = vst [vmem:[#allocation2 + $0x108] sm:$0xff] %v344
    %349 = vst [vmem:[#allocation2 + $0x110] sm:$0xff] %v345
    %350 = vst [vmem:[#allocation2 + $0x118] sm:$0xff] %v346
    %v351 = vld [vmem:[%s1] sm:$0xff]
    %v352 = vld [vmem:[#allocation2] sm:$0xff]
    %v353 = vld [vmem:[#allocation2 + $0x8] sm:$0xff]
    %v354 = vld [vmem:[#allocation2 + $0x10] sm:$0xff]
    %v355 = vld [vmem:[#allocation2 + $0x18] sm:$0xff]
    %v356 = vld [vmem:[#allocation2 + $0x20] sm:$0xff]
    %v357 = vld [vmem:[#allocation2 + $0x28] sm:$0xff]
    %v358 = vld [vmem:[#allocation2 + $0x30] sm:$0xff]
    %v359 = vld [vmem:[#allocation2 + $0x38] sm:$0xff]
    %v360 = vld [vmem:[#allocation2 + $0x40] sm:$0xff]
    %v361 = vld [vmem:[#allocation2 + $0x48] sm:$0xff]
    %v362 = vld [vmem:[#allocation2 + $0x50] sm:$0xff]
    %v363 = vld [vmem:[#allocation2 + $0x58] sm:$0xff]
    %v364 = vld [vmem:[#allocation2 + $0x60] sm:$0xff]
    %v365 = vld [vmem:[#allocation2 + $0x68] sm:$0xff]
    %v366 = vld [vmem:[#allocation2 + $0x70] sm:$0xff]
    %v367 = vld [vmem:[#allocation2 + $0x78] sm:$0xff]
    %v368 = vld [vmem:[#allocation2 + $0x80] sm:$0xff]
    %v369 = vld [vmem:[#allocation2 + $0x88] sm:$0xff]
    %v370 = vld [vmem:[#allocation2 + $0x90] sm:$0xff]
    %v371 = vld [vmem:[#allocation2 + $0x98] sm:$0xff]
    %v372 = vld [vmem:[#allocation2 + $0xa0] sm:$0xff]
    %v373 = vld [vmem:[#allocation2 + $0xa8] sm:$0xff]
    %v374 = vld [vmem:[#allocation2 + $0xb0] sm:$0xff]
    %v375 = vld [vmem:[#allocation2 + $0xb8] sm:$0xff]
    %v376 = vld [vmem:[#allocation2 + $0xc0] sm:$0xff]
    %v377 = vld [vmem:[#allocation2 + $0xc8] sm:$0xff]
    %v378 = vld [vmem:[#allocation2 + $0xd0] sm:$0xff]
    %v379 = vld [vmem:[#allocation2 + $0xd8] sm:$0xff]
    %v380 = vld [vmem:[#allocation2 + $0xe0] sm:$0xff]
    %v381 = vld [vmem:[#allocation2 + $0xe8] sm:$0xff]
    %v382 = vld [vmem:[#allocation2 + $0xf0] sm:$0xff]
    %v383 = vld [vmem:[#allocation2 + $0xf8] sm:$0xff]
    %v384 = vld [vmem:[#allocation2 + $0x100] sm:$0xff]
    %v385 = vld [vmem:[#allocation2 + $0x108] sm:$0xff]
    %v386 = vld [vmem:[#allocation2 + $0x110] sm:$0xff]
    %v387 = vld [vmem:[#allocation2 + $0x118] sm:$0xff]
    %v388 = vld [vmem:[%s2] sm:$0xff]
    %390 = vset.pattern.permute.xlu0 0
    %391 = vperm.xlu0 %390, %v388
    %v392 = vpop.permute.xlu0 %391
    %vm394 = vcmask 588800
    %v396 = vsel %vm394, %v351, 0
    %398 = vmatprep.subr.mxu0 %v353
    %399 = vmatpush1.msra.mxu0 %v352
    %400 = vmatprep.subr.mxu0 %v357
    %401 = vmatpush1.msra.mxu0 %v356
    %402 = vmatprep.subr.mxu0 %v361
    %403 = vmatpush1.msra.mxu0 %v360
    %404 = vmatprep.subr.mxu0 %v365
    %405 = vmatpush1.msra.mxu0 %v364
    %406 = vmatprep.subr.mxu0 %v369
    %407 = vmatpush1.msra.mxu0 %v368
    %408 = vmatprep.subr.mxu0 %v373
    %409 = vmatpush1.msra.mxu0 %v372
    %410 = vmatprep.subr.mxu0 %v377
    %411 = vmatpush1.msra.mxu0 %v376
    %412 = vmatprep.subr.mxu0 %v381
    %413 = vmatpush1.msra.mxu0 %v380
    %414 = vmatprep.subr.mxu0 %v385
    %415 = vmatpush1.msra.mxu0 %v384
    %416 = vmatprep.subr.mxu0 0.0
    %417 = vmatpush1.msra.mxu0 0.0
    %418 = vmatprep.subr.mxu0 0.0
    %419 = vmatpush1.msra.mxu0 0.0
    %420 = vmatprep.subr.mxu0 0.0
    %421 = vmatpush1.msra.mxu0 0.0
    %422 = vmatprep.subr.mxu0 0.0
    %423 = vmatpush1.msra.mxu0 0.0
    %424 = vmatprep.subr.mxu0 0.0
    %425 = vmatpush1.msra.mxu0 0.0
    %426 = vmatprep.subr.mxu0 0.0
    %427 = vmatpush1.msra.mxu0 0.0
    %428 = vmatprep.subr.mxu0 0.0
    %429 = vmatpush1.msra.mxu0 0.0
    %430 = vmatprep.subr.mxu0 0.0
    %431 = vmatpush1.msra.mxu0 0.0
    %432 = vmatprep.subr.mxu0 0.0
    %433 = vmatpush1.msra.mxu0 0.0
    %434 = vmatprep.subr.mxu0 0.0
    %435 = vmatpush1.msra.mxu0 0.0
    %436 = vmatprep.subr.mxu0 0.0
    %437 = vmatpush1.msra.mxu0 0.0
    %438 = vmatprep.subr.mxu0 0.0
    %439 = vmatpush1.msra.mxu0 0.0
    %440 = vmatprep.subr.mxu0 0.0
    %441 = vmatpush1.msra.mxu0 0.0
    %442 = vmatprep.subr.mxu0 0.0
    %443 = vmatpush1.msra.mxu0 0.0
    %444 = vmatprep.subr.mxu0 0.0
    %445 = vmatpush1.msra.mxu0 0.0
    %446 = vmatprep.subr.mxu0 0.0
    %447 = vmatpush1.msra.mxu0 0.0
    %448 = vmatprep.subr.mxu0 0.0
    %449 = vmatpush1.msra.mxu0 0.0
    %450 = vmatprep.subr.mxu0 0.0
    %451 = vmatpush1.msra.mxu0 0.0
    %452 = vmatprep.subr.mxu0 0.0
    %453 = vmatpush1.msra.mxu0 0.0
    %454 = vmatprep.subr.mxu0 0.0
    %455 = vmatpush1.msra.mxu0 0.0
    %456 = vmatprep.subr.mxu0 0.0
    %457 = vmatpush1.msra.mxu0 0.0
    %458 = vmatprep.subr.mxu0 0.0
    %459 = vmatpush1.msra.mxu0 0.0
    %460 = vmatprep.subr.mxu0 0.0
    %461 = vmatpush1.msra.mxu0 0.0
    %462 = vmatprep.mubr.f32.mxu0 0.0
    %463 = vmatmul.mubr.f32.gmra.mrb[0].mxu0 %v396
    %v464 = vpop.f32.mrb[0].mxu0
    %v465 = vadd.f32 %v392, %v464
    %v466 = vpop.f32.mrb[0].mxu0
    %v467 = vadd.f32 %v392, %v466
    %468 = vdwg.mxu0
    %469 = vmatprep.subr.mxu0 %v355
    %470 = vmatpush1.msra.mxu0 %v354
    %471 = vmatprep.subr.mxu0 %v359
    %472 = vmatpush1.msra.mxu0 %v358
    %473 = vmatprep.subr.mxu0 %v363
    %474 = vmatpush1.msra.mxu0 %v362
    %475 = vmatprep.subr.mxu0 %v367
    %476 = vmatpush1.msra.mxu0 %v366
    %477 = vmatprep.subr.mxu0 %v371
    %478 = vmatpush1.msra.mxu0 %v370
    %479 = vmatprep.subr.mxu0 %v375
    %480 = vmatpush1.msra.mxu0 %v374
    %481 = vmatprep.subr.mxu0 %v379
    %482 = vmatpush1.msra.mxu0 %v378
    %483 = vmatprep.subr.mxu0 %v383
    %484 = vmatpush1.msra.mxu0 %v382
    %485 = vmatprep.subr.mxu0 %v387
    %486 = vmatpush1.msra.mxu0 %v386
    %487 = vmatprep.subr.mxu0 0.0
    %488 = vmatpush1.msra.mxu0 0.0
    %489 = vmatprep.subr.mxu0 0.0
    %490 = vmatpush1.msra.mxu0 0.0
    %491 = vmatprep.subr.mxu0 0.0
    %492 = vmatpush1.msra.mxu0 0.0
    %493 = vmatprep.subr.mxu0 0.0
    %494 = vmatpush1.msra.mxu0 0.0
    %495 = vmatprep.subr.mxu0 0.0
    %496 = vmatpush1.msra.mxu0 0.0
    %497 = vmatprep.subr.mxu0 0.0
    %498 = vmatpush1.msra.mxu0 0.0
    %499 = vmatprep.subr.mxu0 0.0
    %500 = vmatpush1.msra.mxu0 0.0
    %501 = vmatprep.subr.mxu0 0.0
    %502 = vmatpush1.msra.mxu0 0.0
    %503 = vmatprep.subr.mxu0 0.0
    %504 = vmatpush1.msra.mxu0 0.0
    %505 = vmatprep.subr.mxu0 0.0
    %506 = vmatpush1.msra.mxu0 0.0
    %507 = vmatprep.subr.mxu0 0.0
    %508 = vmatpush1.msra.mxu0 0.0
    %509 = vmatprep.subr.mxu0 0.0
    %510 = vmatpush1.msra.mxu0 0.0
    %511 = vmatprep.subr.mxu0 0.0
    %512 = vmatpush1.msra.mxu0 0.0
    %513 = vmatprep.subr.mxu0 0.0
    %514 = vmatpush1.msra.mxu0 0.0
    %515 = vmatprep.subr.mxu0 0.0
    %516 = vmatpush1.msra.mxu0 0.0
    %517 = vmatprep.subr.mxu0 0.0
    %518 = vmatpush1.msra.mxu0 0.0
    %519 = vmatprep.subr.mxu0 0.0
    %520 = vmatpush1.msra.mxu0 0.0
    %521 = vmatprep.subr.mxu0 0.0
    %522 = vmatpush1.msra.mxu0 0.0
    %523 = vmatprep.subr.mxu0 0.0
    %524 = vmatpush1.msra.mxu0 0.0
    %525 = vmatprep.subr.mxu0 0.0
    %526 = vmatpush1.msra.mxu0 0.0
    %527 = vmatprep.subr.mxu0 0.0
    %528 = vmatpush1.msra.mxu0 0.0
    %529 = vmatprep.subr.mxu0 0.0
    %530 = vmatpush1.msra.mxu0 0.0
    %531 = vmatprep.subr.mxu0 0.0
    %532 = vmatpush1.msra.mxu0 0.0
    %533 = vmatprep.mubr.f32.mxu0 0.0
    %534 = vmatmul.mubr.f32.gmra.mrb[0].mxu0 %v396
    %v535 = vpop.f32.mrb[0].mxu0
    %v536 = vadd.f32 %v392, %v535
    %v537 = vpop.f32.mrb[0].mxu0
    %v538 = vadd.f32 %v392, %v537
    %539 = vdwg.mxu0
    %v540 = vmul.f32 %v465, 0.2
    %v541 = vmul.f32 %v467, 0.2
    %v542 = vmul.f32 %v536, 0.2
    %v543 = vmul.f32 %v538, 0.2
    %v544 = vmax.f32 %v465, %v540
    %v545 = vmax.f32 %v467, %v541
    %v546 = vmax.f32 %v536, %v542
    %v547 = vmax.f32 %v538, %v543
    %548 = vrot.lane.b32.xlu0 %v544, 17
    %v549 = vpop.permute.xlu0 %548
    %550 = vrot.lane.b32.xlu0 %v545, 17
    %v551 = vpop.permute.xlu0 %550
    %552 = vrot.lane.b32.xlu0 %v546, 17
    %v553 = vpop.permute.xlu0 %552
    %554 = vrot.lane.b32.xlu0 %v547, 17
    %v555 = vpop.permute.xlu0 %554
    %v556 = vsel %vm123, %v553, %v555
    %v557 = vsel %vm123, %v551, %v553
    %v558 = vsel %vm123, %v549, %v551
    %v559 = vsel %vm123, %v555, %v549
    %v560 = vsel %vm132, %v559, 0.0
    %v561 = vsel %vm133, %v558, 0.0
    %v562 = vsel %vm134, %v557, 0.0
    %v563 = vsel %vm135, %v556, 0.0
    %564 = vst [vmem:[#allocation2] sm:$0xff] %v560
    %565 = vst [vmem:[#allocation2 + $0x8] sm:$0xff] %v561
    %566 = vst [vmem:[#allocation2 + $0x10] sm:$0xff] %v562
    %567 = vst [vmem:[#allocation2 + $0x18] sm:$0xff] %v563
    %568 = vrot.lane.b32.xlu0 %v544, 16
    %v569 = vpop.permute.xlu0 %568
    %570 = vrot.lane.b32.xlu0 %v545, 16
    %v571 = vpop.permute.xlu0 %570
    %572 = vrot.lane.b32.xlu0 %v546, 16
    %v573 = vpop.permute.xlu0 %572
    %574 = vrot.lane.b32.xlu0 %v547, 16
    %v575 = vpop.permute.xlu0 %574
    %v576 = vsel %vm152, %v573, %v575
    %v577 = vsel %vm152, %v571, %v573
    %v578 = vsel %vm152, %v569, %v571
    %v579 = vsel %vm152, %v575, %v569
    %v580 = vsel %vm161, %v579, 0.0
    %v581 = vsel %vm162, %v578, 0.0
    %v582 = vsel %vm163, %v577, 0.0
    %v583 = vsel %vm164, %v576, 0.0
    %584 = vst [vmem:[#allocation2 + $0x20] sm:$0xff] %v580
    %585 = vst [vmem:[#allocation2 + $0x28] sm:$0xff] %v581
    %586 = vst [vmem:[#allocation2 + $0x30] sm:$0xff] %v582
    %587 = vst [vmem:[#allocation2 + $0x38] sm:$0xff] %v583
    %588 = vrot.lane.b32.xlu0 %v544, 15
    %v589 = vpop.permute.xlu0 %588
    %590 = vrot.lane.b32.xlu0 %v545, 15
    %v591 = vpop.permute.xlu0 %590
    %592 = vrot.lane.b32.xlu0 %v546, 15
    %v593 = vpop.permute.xlu0 %592
    %594 = vrot.lane.b32.xlu0 %v547, 15
    %v595 = vpop.permute.xlu0 %594
    %v596 = vsel %vm181, %v593, %v595
    %v597 = vsel %vm181, %v591, %v593
    %v598 = vsel %vm181, %v589, %v591
    %v599 = vsel %vm181, %v595, %v589
    %v600 = vsel %vm190, %v599, 0.0
    %v601 = vsel %vm191, %v598, 0.0
    %v602 = vsel %vm192, %v597, 0.0
    %v603 = vsel %vm193, %v596, 0.0
    %604 = vst [vmem:[#allocation2 + $0x40] sm:$0xff] %v600
    %605 = vst [vmem:[#allocation2 + $0x48] sm:$0xff] %v601
    %606 = vst [vmem:[#allocation2 + $0x50] sm:$0xff] %v602
    %607 = vst [vmem:[#allocation2 + $0x58] sm:$0xff] %v603
    %608 = vrot.lane.b32.xlu0 %v544, 1
    %v609 = vpop.permute.xlu0 %608
    %610 = vrot.lane.b32.xlu0 %v545, 1
    %v611 = vpop.permute.xlu0 %610
    %612 = vrot.lane.b32.xlu0 %v546, 1
    %v613 = vpop.permute.xlu0 %612
    %614 = vrot.lane.b32.xlu0 %v547, 1
    %v615 = vpop.permute.xlu0 %614
    %v616 = vsel %vm210, %v613, %v615
    %v617 = vsel %vm210, %v611, %v613
    %v618 = vsel %vm210, %v609, %v611
    %v619 = vsel %vm210, %v615, %v609
    %v620 = vsel %vm219, %v619, 0.0
    %v621 = vsel %vm220, %v618, 0.0
    %v622 = vsel %vm221, %v617, 0.0
    %v623 = vsel %vm222, %v616, 0.0
    %624 = vst [vmem:[#allocation2 + $0x60] sm:$0xff] %v620
    %625 = vst [vmem:[#allocation2 + $0x68] sm:$0xff] %v621
    %626 = vst [vmem:[#allocation2 + $0x70] sm:$0xff] %v622
    %627 = vst [vmem:[#allocation2 + $0x78] sm:$0xff] %v623
    %628 = vst [vmem:[#allocation2 + $0x80] sm:$0xff] %v544
    %629 = vst [vmem:[#allocation2 + $0x88] sm:$0xff] %v545
    %630 = vst [vmem:[#allocation2 + $0x90] sm:$0xff] %v546
    %631 = vst [vmem:[#allocation2 + $0x98] sm:$0xff] %v547
    %632 = vrot.lane.b32.xlu0 %v544, 127
    %v633 = vpop.permute.xlu0 %632
    %634 = vrot.lane.b32.xlu0 %v545, 127
    %v635 = vpop.permute.xlu0 %634
    %636 = vrot.lane.b32.xlu0 %v546, 127
    %v637 = vpop.permute.xlu0 %636
    %638 = vrot.lane.b32.xlu0 %v547, 127
    %v639 = vpop.permute.xlu0 %638
    %v640 = vsel %vm243, %v637, %v639
    %v641 = vsel %vm243, %v635, %v637
    %v642 = vsel %vm243, %v633, %v635
    %v643 = vsel %vm243, %v639, %v633
    %v644 = vsel %vm252, %v642, 0.0
    %v645 = vsel %vm253, %v641, 0.0
    %v646 = vsel %vm254, %v640, 0.0
    %v647 = vsel %vm255, %v643, 0.0
    %648 = vst [vmem:[#allocation2 + $0xa0] sm:$0xff] %v644
    %649 = vst [vmem:[#allocation2 + $0xa8] sm:$0xff] %v645
    %650 = vst [vmem:[#allocation2 + $0xb0] sm:$0xff] %v646
    %651 = vst [vmem:[#allocation2 + $0xb8] sm:$0xff] %v647
    %652 = vrot.lane.b32.xlu0 %v544, 113
    %v653 = vpop.permute.xlu0 %652
    %654 = vrot.lane.b32.xlu0 %v545, 113
    %v655 = vpop.permute.xlu0 %654
    %656 = vrot.lane.b32.xlu0 %v546, 113
    %v657 = vpop.permute.xlu0 %656
    %658 = vrot.lane.b32.xlu0 %v547, 113
    %v659 = vpop.permute.xlu0 %658
    %v660 = vsel %vm272, %v657, %v659
    %v661 = vsel %vm272, %v655, %v657
    %v662 = vsel %vm272, %v653, %v655
    %v663 = vsel %vm272, %v659, %v653
    %v664 = vsel %vm281, %v662, 0.0
    %v665 = vsel %vm282, %v661, 0.0
    %v666 = vsel %vm283, %v660, 0.0
    %v667 = vsel %vm284, %v663, 0.0
    %668 = vst [vmem:[#allocation2 + $0xc0] sm:$0xff] %v664
    %669 = vst [vmem:[#allocation2 + $0xc8] sm:$0xff] %v665
    %670 = vst [vmem:[#allocation2 + $0xd0] sm:$0xff] %v666
    %671 = vst [vmem:[#allocation2 + $0xd8] sm:$0xff] %v667
    %672 = vrot.lane.b32.xlu0 %v544, 112
    %v673 = vpop.permute.xlu0 %672
    %674 = vrot.lane.b32.xlu0 %v545, 112
    %v675 = vpop.permute.xlu0 %674
    %676 = vrot.lane.b32.xlu0 %v546, 112
    %v677 = vpop.permute.xlu0 %676
    %678 = vrot.lane.b32.xlu0 %v547, 112
    %v679 = vpop.permute.xlu0 %678
    %v680 = vsel %vm301, %v677, %v679
    %v681 = vsel %vm301, %v675, %v677
    %v682 = vsel %vm301, %v673, %v675
    %v683 = vsel %vm301, %v679, %v673
    %v684 = vsel %vm310, %v682, 0.0
    %v685 = vsel %vm311, %v681, 0.0
    %v686 = vsel %vm312, %v680, 0.0
    %v687 = vsel %vm313, %v683, 0.0
    %688 = vst [vmem:[#allocation2 + $0xe0] sm:$0xff] %v684
    %689 = vst [vmem:[#allocation2 + $0xe8] sm:$0xff] %v685
    %690 = vst [vmem:[#allocation2 + $0xf0] sm:$0xff] %v686
    %691 = vst [vmem:[#allocation2 + $0xf8] sm:$0xff] %v687
    %692 = vrot.lane.b32.xlu0 %v544, 111
    %v693 = vpop.permute.xlu0 %692
    %694 = vrot.lane.b32.xlu0 %v545, 111
    %v695 = vpop.permute.xlu0 %694
    %696 = vrot.lane.b32.xlu0 %v546, 111
    %v697 = vpop.permute.xlu0 %696
    %698 = vrot.lane.b32.xlu0 %v547, 111
    %v699 = vpop.permute.xlu0 %698
    %v700 = vsel %vm330, %v697, %v699
    %v701 = vsel %vm330, %v695, %v697
    %v702 = vsel %vm330, %v693, %v695
    %v703 = vsel %vm330, %v699, %v693
    %v704 = vsel %vm339, %v702, 0.0
    %v705 = vsel %vm340, %v701, 0.0
    %v706 = vsel %vm341, %v700, 0.0
    %v707 = vsel %vm342, %v703, 0.0
    %708 = vst [vmem:[#allocation2 + $0x100] sm:$0xff] %v704
    %709 = vst [vmem:[#allocation2 + $0x108] sm:$0xff] %v705
    %710 = vst [vmem:[#allocation2 + $0x110] sm:$0xff] %v706
    %711 = vst [vmem:[#allocation2 + $0x118] sm:$0xff] %v707
    %v712 = vld [vmem:[%s3] sm:$0xff]
    %v713 = vld [vmem:[#allocation2] sm:$0xff]
    %v714 = vld [vmem:[#allocation2 + $0x8] sm:$0xff]
    %v715 = vld [vmem:[#allocation2 + $0x10] sm:$0xff]
    %v716 = vld [vmem:[#allocation2 + $0x18] sm:$0xff]
    %v717 = vld [vmem:[#allocation2 + $0x20] sm:$0xff]
    %v718 = vld [vmem:[#allocation2 + $0x28] sm:$0xff]
    %v719 = vld [vmem:[#allocation2 + $0x30] sm:$0xff]
    %v720 = vld [vmem:[#allocation2 + $0x38] sm:$0xff]
    %v721 = vld [vmem:[#allocation2 + $0x40] sm:$0xff]
    %v722 = vld [vmem:[#allocation2 + $0x48] sm:$0xff]
    %v723 = vld [vmem:[#allocation2 + $0x50] sm:$0xff]
    %v724 = vld [vmem:[#allocation2 + $0x58] sm:$0xff]
    %v725 = vld [vmem:[#allocation2 + $0x60] sm:$0xff]
    %v726 = vld [vmem:[#allocation2 + $0x68] sm:$0xff]
    %v727 = vld [vmem:[#allocation2 + $0x70] sm:$0xff]
    %v728 = vld [vmem:[#allocation2 + $0x78] sm:$0xff]
    %v729 = vld [vmem:[#allocation2 + $0x80] sm:$0xff]
    %v730 = vld [vmem:[#allocation2 + $0x88] sm:$0xff]
    %v731 = vld [vmem:[#allocation2 + $0x90] sm:$0xff]
    %v732 = vld [vmem:[#allocation2 + $0x98] sm:$0xff]
    %v733 = vld [vmem:[#allocation2 + $0xa0] sm:$0xff]
    %v734 = vld [vmem:[#allocation2 + $0xa8] sm:$0xff]
    %v735 = vld [vmem:[#allocation2 + $0xb0] sm:$0xff]
    %v736 = vld [vmem:[#allocation2 + $0xb8] sm:$0xff]
    %v737 = vld [vmem:[#allocation2 + $0xc0] sm:$0xff]
    %v738 = vld [vmem:[#allocation2 + $0xc8] sm:$0xff]
    %v739 = vld [vmem:[#allocation2 + $0xd0] sm:$0xff]
    %v740 = vld [vmem:[#allocation2 + $0xd8] sm:$0xff]
    %v741 = vld [vmem:[#allocation2 + $0xe0] sm:$0xff]
    %v742 = vld [vmem:[#allocation2 + $0xe8] sm:$0xff]
    %v743 = vld [vmem:[#allocation2 + $0xf0] sm:$0xff]
    %v744 = vld [vmem:[#allocation2 + $0xf8] sm:$0xff]
    %v745 = vld [vmem:[#allocation2 + $0x100] sm:$0xff]
    %v746 = vld [vmem:[#allocation2 + $0x108] sm:$0xff]
    %v747 = vld [vmem:[#allocation2 + $0x110] sm:$0xff]
    %v748 = vld [vmem:[#allocation2 + $0x118] sm:$0xff]
    %v749 = vld [vmem:[#allocation2 + $0x120] sm:$0xff]
    %v750 = vld [vmem:[#allocation2 + $0x128] sm:$0xff]
    %v751 = vld [vmem:[#allocation2 + $0x130] sm:$0xff]
    %v752 = vld [vmem:[#allocation2 + $0x138] sm:$0xff]
    %v753 = vld [vmem:[%s4] sm:$0xff]
    %755 = vset.pattern.permute.xlu0 0
    %756 = vperm.xlu0 %755, %v753
    %v757 = vpop.permute.xlu0 %756
    %vm759 = vcmask 654336
    %v761 = vsel %vm759, %v712, 0
    %763 = vmatprep.subr.mxu0 %v714
    %764 = vmatpush1.msra.mxu0 %v713
    %765 = vmatprep.subr.mxu0 %v718
    %766 = vmatpush1.msra.mxu0 %v717
    %767 = vmatprep.subr.mxu0 %v722
    %768 = vmatpush1.msra.mxu0 %v721
    %769 = vmatprep.subr.mxu0 %v726
    %770 = vmatpush1.msra.mxu0 %v725
    %771 = vmatprep.subr.mxu0 %v730
    %772 = vmatpush1.msra.mxu0 %v729
    %773 = vmatprep.subr.mxu0 %v734
    %774 = vmatpush1.msra.mxu0 %v733
    %775 = vmatprep.subr.mxu0 %v738
    %776 = vmatpush1.msra.mxu0 %v737
    %777 = vmatprep.subr.mxu0 %v742
    %778 = vmatpush1.msra.mxu0 %v741
    %779 = vmatprep.subr.mxu0 %v746
    %780 = vmatpush1.msra.mxu0 %v745
    %781 = vmatprep.subr.mxu0 %v750
    %782 = vmatpush1.msra.mxu0 %v749
    %783 = vmatprep.subr.mxu0 0.0
    %784 = vmatpush1.msra.mxu0 0.0
    %785 = vmatprep.subr.mxu0 0.0
    %786 = vmatpush1.msra.mxu0 0.0
    %787 = vmatprep.subr.mxu0 0.0
    %788 = vmatpush1.msra.mxu0 0.0
    %789 = vmatprep.subr.mxu0 0.0
    %790 = vmatpush1.msra.mxu0 0.0
    %791 = vmatprep.subr.mxu0 0.0
    %792 = vmatpush1.msra.mxu0 0.0
    %793 = vmatprep.subr.mxu0 0.0
    %794 = vmatpush1.msra.mxu0 0.0
    %795 = vmatprep.subr.mxu0 0.0
    %796 = vmatpush1.msra.mxu0 0.0
    %797 = vmatprep.subr.mxu0 0.0
    %798 = vmatpush1.msra.mxu0 0.0
    %799 = vmatprep.subr.mxu0 0.0
    %800 = vmatpush1.msra.mxu0 0.0
    %801 = vmatprep.subr.mxu0 0.0
    %802 = vmatpush1.msra.mxu0 0.0
    %803 = vmatprep.subr.mxu0 0.0
    %804 = vmatpush1.msra.mxu0 0.0
    %805 = vmatprep.subr.mxu0 0.0
    %806 = vmatpush1.msra.mxu0 0.0
    %807 = vmatprep.subr.mxu0 0.0
    %808 = vmatpush1.msra.mxu0 0.0
    %809 = vmatprep.subr.mxu0 0.0
    %810 = vmatpush1.msra.mxu0 0.0
    %811 = vmatprep.subr.mxu0 0.0
    %812 = vmatpush1.msra.mxu0 0.0
    %813 = vmatprep.subr.mxu0 0.0
    %814 = vmatpush1.msra.mxu0 0.0
    %815 = vmatprep.subr.mxu0 0.0
    %816 = vmatpush1.msra.mxu0 0.0
    %817 = vmatprep.subr.mxu0 0.0
    %818 = vmatpush1.msra.mxu0 0.0
    %819 = vmatprep.subr.mxu0 0.0
    %820 = vmatpush1.msra.mxu0 0.0
    %821 = vmatprep.subr.mxu0 0.0
    %822 = vmatpush1.msra.mxu0 0.0
    %823 = vmatprep.subr.mxu0 0.0
    %824 = vmatpush1.msra.mxu0 0.0
    %825 = vmatprep.subr.mxu0 0.0
    %826 = vmatpush1.msra.mxu0 0.0
    %827 = vmatprep.mubr.f32.mxu0 0.0
    %828 = vmatmul.mubr.f32.gmra.mrb[0].mxu0 %v761
    %v829 = vpop.f32.mrb[0].mxu0
    %v830 = vadd.f32 %v757, %v829
    %v831 = vpop.f32.mrb[0].mxu0
    %v832 = vadd.f32 %v757, %v831
    %833 = vdwg.mxu0
    %834 = vmatprep.subr.mxu0 %v716
    %835 = vmatpush1.msra.mxu0 %v715
    %836 = vmatprep.subr.mxu0 %v720
    %837 = vmatpush1.msra.mxu0 %v719
    %838 = vmatprep.subr.mxu0 %v724
    %839 = vmatpush1.msra.mxu0 %v723
    %840 = vmatprep.subr.mxu0 %v728
    %841 = vmatpush1.msra.mxu0 %v727
    %842 = vmatprep.subr.mxu0 %v732
    %843 = vmatpush1.msra.mxu0 %v731
    %844 = vmatprep.subr.mxu0 %v736
    %845 = vmatpush1.msra.mxu0 %v735
    %846 = vmatprep.subr.mxu0 %v740
    %847 = vmatpush1.msra.mxu0 %v739
    %848 = vmatprep.subr.mxu0 %v744
    %849 = vmatpush1.msra.mxu0 %v743
    %850 = vmatprep.subr.mxu0 %v748
    %851 = vmatpush1.msra.mxu0 %v747
    %852 = vmatprep.subr.mxu0 %v752
    %853 = vmatpush1.msra.mxu0 %v751
    %854 = vmatprep.subr.mxu0 0.0
    %855 = vmatpush1.msra.mxu0 0.0
    %856 = vmatprep.subr.mxu0 0.0
    %857 = vmatpush1.msra.mxu0 0.0
    %858 = vmatprep.subr.mxu0 0.0
    %859 = vmatpush1.msra.mxu0 0.0
    %860 = vmatprep.subr.mxu0 0.0
    %861 = vmatpush1.msra.mxu0 0.0
    %862 = vmatprep.subr.mxu0 0.0
    %863 = vmatpush1.msra.mxu0 0.0
    %864 = vmatprep.subr.mxu0 0.0
    %865 = vmatpush1.msra.mxu0 0.0
    %866 = vmatprep.subr.mxu0 0.0
    %867 = vmatpush1.msra.mxu0 0.0
    %868 = vmatprep.subr.mxu0 0.0
    %869 = vmatpush1.msra.mxu0 0.0
    %870 = vmatprep.subr.mxu0 0.0
    %871 = vmatpush1.msra.mxu0 0.0
    %872 = vmatprep.subr.mxu0 0.0
    %873 = vmatpush1.msra.mxu0 0.0
    %874 = vmatprep.subr.mxu0 0.0
    %875 = vmatpush1.msra.mxu0 0.0
    %876 = vmatprep.subr.mxu0 0.0
    %877 = vmatpush1.msra.mxu0 0.0
    %878 = vmatprep.subr.mxu0 0.0
    %879 = vmatpush1.msra.mxu0 0.0
    %880 = vmatprep.subr.mxu0 0.0
    %881 = vmatpush1.msra.mxu0 0.0
    %882 = vmatprep.subr.mxu0 0.0
    %883 = vmatpush1.msra.mxu0 0.0
    %884 = vmatprep.subr.mxu0 0.0
    %885 = vmatpush1.msra.mxu0 0.0
    %886 = vmatprep.subr.mxu0 0.0
    %887 = vmatpush1.msra.mxu0 0.0
    %888 = vmatprep.subr.mxu0 0.0
    %889 = vmatpush1.msra.mxu0 0.0
    %890 = vmatprep.subr.mxu0 0.0
    %891 = vmatpush1.msra.mxu0 0.0
    %892 = vmatprep.subr.mxu0 0.0
    %893 = vmatpush1.msra.mxu0 0.0
    %894 = vmatprep.subr.mxu0 0.0
    %895 = vmatpush1.msra.mxu0 0.0
    %896 = vmatprep.subr.mxu0 0.0
    %897 = vmatpush1.msra.mxu0 0.0
    %898 = vmatprep.mubr.f32.mxu0 0.0
    %899 = vmatmul.mubr.f32.gmra.mrb[0].mxu0 %v761
    %v900 = vpop.f32.mrb[0].mxu0
    %v901 = vadd.f32 %v757, %v900
    %v902 = vpop.f32.mrb[0].mxu0
    %v903 = vadd.f32 %v757, %v902
    %904 = vdwg.mxu0
    %v905 = vld [vmem:[#allocation6] sm:$0xff]
    %v906 = vld [vmem:[#allocation6 + $0x8] sm:$0xff]
    %v907 = vld [vmem:[#allocation6 + $0x10] sm:$0xff]
    %v908 = vld [vmem:[#allocation6 + $0x18] sm:$0xff]
    %v909 = vld [vmem:[#allocation6 + $0x20] sm:$0xff]
    %v910 = vld [vmem:[#allocation6 + $0x28] sm:$0xff]
    %v911 = vld [vmem:[#allocation6 + $0x30] sm:$0xff]
    %v912 = vld [vmem:[#allocation6 + $0x38] sm:$0xff]
    %v913 = vld [vmem:[#allocation6 + $0x40] sm:$0xff]
    %v914 = vld [vmem:[#allocation6 + $0x48] sm:$0xff]
    %v915 = vld [vmem:[#allocation6 + $0x50] sm:$0xff]
    %v916 = vld [vmem:[#allocation6 + $0x58] sm:$0xff]
    %v917 = vld [vmem:[#allocation6 + $0x60] sm:$0xff]
    %v918 = vld [vmem:[#allocation6 + $0x68] sm:$0xff]
    %v919 = vld [vmem:[#allocation6 + $0x70] sm:$0xff]
    %v920 = vld [vmem:[#allocation6 + $0x78] sm:$0xff]
    %v921 = vld [vmem:[#allocation6 + $0x80] sm:$0xff]
    %v922 = vld [vmem:[#allocation6 + $0x88] sm:$0xff]
    %v923 = vld [vmem:[#allocation6 + $0x90] sm:$0xff]
    %v924 = vld [vmem:[#allocation6 + $0x98] sm:$0xff]
    %v925 = vld [vmem:[#allocation6 + $0xa0] sm:$0xff]
    %v926 = vld [vmem:[#allocation6 + $0xa8] sm:$0xff]
    %v927 = vld [vmem:[#allocation6 + $0xb0] sm:$0xff]
    %v928 = vld [vmem:[#allocation6 + $0xb8] sm:$0xff]
    %v929 = vld [vmem:[#allocation6 + $0xc0] sm:$0xff]
    %v930 = vld [vmem:[#allocation6 + $0xc8] sm:$0xff]
    %v931 = vld [vmem:[#allocation6 + $0xd0] sm:$0xff]
    %v932 = vld [vmem:[#allocation6 + $0xd8] sm:$0xff]
    %v933 = vld [vmem:[#allocation6 + $0xe0] sm:$0xff]
    %v934 = vld [vmem:[#allocation6 + $0xe8] sm:$0xff]
    %v935 = vld [vmem:[#allocation6 + $0xf0] sm:$0xff]
    %v936 = vld [vmem:[#allocation6 + $0xf8] sm:$0xff]
    %v937 = vld [vmem:[#allocation6 + $0x100] sm:$0xff]
    %v938 = vld [vmem:[#allocation6 + $0x108] sm:$0xff]
    %v939 = vld [vmem:[#allocation6 + $0x110] sm:$0xff]
    %v940 = vld [vmem:[#allocation6 + $0x118] sm:$0xff]
    %v941 = vld [vmem:[#allocation6 + $0x120] sm:$0xff]
    %v942 = vld [vmem:[#allocation6 + $0x128] sm:$0xff]
    %v943 = vld [vmem:[#allocation6 + $0x130] sm:$0xff]
    %v944 = vld [vmem:[#allocation6 + $0x138] sm:$0xff]
    %v945 = vld [vmem:[#allocation6 + $0x140] sm:$0xff]
    %v946 = vld [vmem:[#allocation6 + $0x148] sm:$0xff]
    %v947 = vld [vmem:[#allocation6 + $0x150] sm:$0xff]
    %v948 = vld [vmem:[#allocation6 + $0x158] sm:$0xff]
    %v949 = vld [vmem:[#allocation6 + $0x160] sm:$0xff]
    %v950 = vld [vmem:[#allocation6 + $0x168] sm:$0xff]
    %v951 = vld [vmem:[#allocation6 + $0x170] sm:$0xff]
    %v952 = vld [vmem:[#allocation6 + $0x178] sm:$0xff]
    %v953 = vld [vmem:[#allocation6 + $0x180] sm:$0xff]
    %v954 = vld [vmem:[#allocation6 + $0x188] sm:$0xff]
    %v955 = vld [vmem:[#allocation6 + $0x190] sm:$0xff]
    %v956 = vld [vmem:[#allocation6 + $0x198] sm:$0xff]
    %v957 = vld [vmem:[#allocation6 + $0x1a0] sm:$0xff]
    %v958 = vld [vmem:[#allocation6 + $0x1a8] sm:$0xff]
    %v959 = vld [vmem:[#allocation6 + $0x1b0] sm:$0xff]
    %v960 = vld [vmem:[#allocation6 + $0x1b8] sm:$0xff]
    %v961 = vld [vmem:[#allocation6 + $0x1c0] sm:$0xff]
    %v962 = vld [vmem:[#allocation6 + $0x1c8] sm:$0xff]
    %v963 = vld [vmem:[#allocation6 + $0x1d0] sm:$0xff]
    %v964 = vld [vmem:[#allocation6 + $0x1d8] sm:$0xff]
    %v965 = vld [vmem:[#allocation6 + $0x1e0] sm:$0xff]
    %v966 = vld [vmem:[#allocation6 + $0x1e8] sm:$0xff]
    %v967 = vld [vmem:[#allocation6 + $0x1f0] sm:$0xff]
    %v968 = vld [vmem:[#allocation6 + $0x1f8] sm:$0xff]
    %969 = vmatprep.subr.mxu0 0.0
    %970 = vmatpush1.msra.mxu0 %v905
    %971 = vmatprep.subr.mxu0 0.0
    %972 = vmatpush1.msra.mxu0 %v906
    %973 = vmatprep.subr.mxu0 0.0
    %974 = vmatpush1.msra.mxu0 %v907
    %975 = vmatprep.subr.mxu0 0.0
    %976 = vmatpush1.msra.mxu0 %v908
    %977 = vmatprep.subr.mxu0 0.0
    %978 = vmatpush1.msra.mxu0 %v909
    %979 = vmatprep.subr.mxu0 0.0
    %980 = vmatpush1.msra.mxu0 %v910
    %981 = vmatprep.subr.mxu0 0.0
    %982 = vmatpush1.msra.mxu0 %v911
    %983 = vmatprep.subr.mxu0 0.0
    %984 = vmatpush1.msra.mxu0 %v912
    %985 = vmatprep.subr.mxu0 0.0
    %986 = vmatpush1.msra.mxu0 %v913
    %987 = vmatprep.subr.mxu0 0.0
    %988 = vmatpush1.msra.mxu0 %v914
    %989 = vmatprep.subr.mxu0 0.0
    %990 = vmatpush1.msra.mxu0 %v915
    %991 = vmatprep.subr.mxu0 0.0
    %992 = vmatpush1.msra.mxu0 %v916
    %993 = vmatprep.subr.mxu0 0.0
    %994 = vmatpush1.msra.mxu0 %v917
    %995 = vmatprep.subr.mxu0 0.0
    %996 = vmatpush1.msra.mxu0 %v918
    %997 = vmatprep.subr.mxu0 0.0
    %998 = vmatpush1.msra.mxu0 %v919
    %999 = vmatprep.subr.mxu0 0.0
    %1000 = vmatpush1.msra.mxu0 %v920
    %1001 = vmatprep.subr.mxu0 0.0
    %1002 = vmatpush1.msra.mxu0 %v921
    %1003 = vmatprep.subr.mxu0 0.0
    %1004 = vmatpush1.msra.mxu0 %v922
    %1005 = vmatprep.subr.mxu0 0.0
    %1006 = vmatpush1.msra.mxu0 %v923
    %1007 = vmatprep.subr.mxu0 0.0
    %1008 = vmatpush1.msra.mxu0 %v924
    %1009 = vmatprep.subr.mxu0 0.0
    %1010 = vmatpush1.msra.mxu0 %v925
    %1011 = vmatprep.subr.mxu0 0.0
    %1012 = vmatpush1.msra.mxu0 %v926
    %1013 = vmatprep.subr.mxu0 0.0
    %1014 = vmatpush1.msra.mxu0 %v927
    %1015 = vmatprep.subr.mxu0 0.0
    %1016 = vmatpush1.msra.mxu0 %v928
    %1017 = vmatprep.subr.mxu0 0.0
    %1018 = vmatpush1.msra.mxu0 %v929
    %1019 = vmatprep.subr.mxu0 0.0
    %1020 = vmatpush1.msra.mxu0 %v930
    %1021 = vmatprep.subr.mxu0 0.0
    %1022 = vmatpush1.msra.mxu0 %v931
    %1023 = vmatprep.subr.mxu0 0.0
    %1024 = vmatpush1.msra.mxu0 %v932
    %1025 = vmatprep.subr.mxu0 0.0
    %1026 = vmatpush1.msra.mxu0 %v933
    %1027 = vmatprep.subr.mxu0 0.0
    %1028 = vmatpush1.msra.mxu0 %v934
    %1029 = vmatprep.subr.mxu0 0.0
    %1030 = vmatpush1.msra.mxu0 %v935
    %1031 = vmatprep.subr.mxu0 0.0
    %1032 = vmatpush1.msra.mxu0 %v936
    %1033 = vmatprep.mubr.f32.mxu0 %v832
    %1034 = vmatmul.mubr.f32.gmra.mrb[0].mxu0 %v830
    %v1035 = vpop.f32.mrb[0].mxu0
    %v1036 = vadd.f32 0.0, %v1035
    %v1037 = vpop.f32.mrb[0].mxu0
    %1038 = vdwg.mxu0
    %1039 = vmatprep.subr.mxu0 0.0
    %1040 = vmatpush1.msra.mxu0 %v937
    %1041 = vmatprep.subr.mxu0 0.0
    %1042 = vmatpush1.msra.mxu0 %v938
    %1043 = vmatprep.subr.mxu0 0.0
    %1044 = vmatpush1.msra.mxu0 %v939
    %1045 = vmatprep.subr.mxu0 0.0
    %1046 = vmatpush1.msra.mxu0 %v940
    %1047 = vmatprep.subr.mxu0 0.0
    %1048 = vmatpush1.msra.mxu0 %v941
    %1049 = vmatprep.subr.mxu0 0.0
    %1050 = vmatpush1.msra.mxu0 %v942
    %1051 = vmatprep.subr.mxu0 0.0
    %1052 = vmatpush1.msra.mxu0 %v943
    %1053 = vmatprep.subr.mxu0 0.0
    %1054 = vmatpush1.msra.mxu0 %v944
    %1055 = vmatprep.subr.mxu0 0.0
    %1056 = vmatpush1.msra.mxu0 %v945
    %1057 = vmatprep.subr.mxu0 0.0
    %1058 = vmatpush1.msra.mxu0 %v946
    %1059 = vmatprep.subr.mxu0 0.0
    %1060 = vmatpush1.msra.mxu0 %v947
    %1061 = vmatprep.subr.mxu0 0.0
    %1062 = vmatpush1.msra.mxu0 %v948
    %1063 = vmatprep.subr.mxu0 0.0
    %1064 = vmatpush1.msra.mxu0 %v949
    %1065 = vmatprep.subr.mxu0 0.0
    %1066 = vmatpush1.msra.mxu0 %v950
    %1067 = vmatprep.subr.mxu0 0.0
    %1068 = vmatpush1.msra.mxu0 %v951
    %1069 = vmatprep.subr.mxu0 0.0
    %1070 = vmatpush1.msra.mxu0 %v952
    %1071 = vmatprep.subr.mxu0 0.0
    %1072 = vmatpush1.msra.mxu0 %v953
    %1073 = vmatprep.subr.mxu0 0.0
    %1074 = vmatpush1.msra.mxu0 %v954
    %1075 = vmatprep.subr.mxu0 0.0
    %1076 = vmatpush1.msra.mxu0 %v955
    %1077 = vmatprep.subr.mxu0 0.0
    %1078 = vmatpush1.msra.mxu0 %v956
    %1079 = vmatprep.subr.mxu0 0.0
    %1080 = vmatpush1.msra.mxu0 %v957
    %1081 = vmatprep.subr.mxu0 0.0
    %1082 = vmatpush1.msra.mxu0 %v958
    %1083 = vmatprep.subr.mxu0 0.0
    %1084 = vmatpush1.msra.mxu0 %v959
    %1085 = vmatprep.subr.mxu0 0.0
    %1086 = vmatpush1.msra.mxu0 %v960
    %1087 = vmatprep.subr.mxu0 0.0
    %1088 = vmatpush1.msra.mxu0 %v961
    %1089 = vmatprep.subr.mxu0 0.0
    %1090 = vmatpush1.msra.mxu0 %v962
    %1091 = vmatprep.subr.mxu0 0.0
    %1092 = vmatpush1.msra.mxu0 %v963
    %1093 = vmatprep.subr.mxu0 0.0
    %1094 = vmatpush1.msra.mxu0 %v964
    %1095 = vmatprep.subr.mxu0 0.0
    %1096 = vmatpush1.msra.mxu0 %v965
    %1097 = vmatprep.subr.mxu0 0.0
    %1098 = vmatpush1.msra.mxu0 %v966
    %1099 = vmatprep.subr.mxu0 0.0
    %1100 = vmatpush1.msra.mxu0 %v967
    %1101 = vmatprep.subr.mxu0 0.0
    %1102 = vmatpush1.msra.mxu0 %v968
    %1103 = vmatprep.mubr.f32.mxu0 %v903
    %1104 = vmatmul.mubr.f32.gmra.mrb[0].mxu0 %v901
    %v1105 = vpop.f32.mrb[0].mxu0
    %v1106 = vadd.f32 %v1036, %v1105
    %v1107 = vpop.f32.mrb[0].mxu0
    %1108 = vdwg.mxu0
    %1109 = vst [vmem:[#allocation8] sm:$0xff] %v1106
    // Predicated region
    $region34: #{tpu_custom_call.1} parent=1 // pred_check
      _
    $region35: #{tpu_custom_call.1} parent=1 // pred_check_branch
      %1111 = sbr.rel (0) target = $region37
    $region36: #{tpu_custom_call.1} parent=1 // pred_region
      %s1113 = ssub.s32 128, 128
      %1114 = vsyncadd [#allocation5], %s1113
      %s1116 = sshll.u32 [#allocation8], 4
      %s1117 = int_to_ptr.vmem [resolvable:$true] %s1116
      %1119 = dma.vmem_to_hbm [thread:$0]  %s1117, 128, %s6, [#allocation5]
    $region37: #{tpu_custom_call.1} parent=1 // pred_fallthru
      _
    // Predicated region
    $region38: #{tpu_custom_call.1} parent=1 // pred_check
      _
    $region39: #{tpu_custom_call.1} parent=1 // pred_check_branch
      %1121 = sbr.rel (0) target = $region41
    $region40: #{tpu_custom_call.1} parent=1 // pred_region
      %1122 = dma.done [#allocation5], 128
    $region41: #{tpu_custom_call.1} parent=1 // pred_fallthru
      _
    %1123 = vsyncpa [#allocation4], 1
    %1124 = vsyncpa [#allocation7], 1
    %1125 = vsyncpa [#allocation5], 1

</llo_original>
